<compile_context>
chip_gen: v5e
topology: v5e:2x2
jax: 0.10.0
libtpu: 0.0.40
codegen_flags: <defaults>
</compile_context>

<pallas_src>
import functools

import jax
import jax.numpy as jnp
from jax.experimental import pallas as pl
from jax.experimental.pallas import tpu as pltpu

# Sizes implied by the module (mygame() supplies N_STATES / N_ACTIONS; small
# deterministic stand-ins consistent with a tiny RL env).
# TODO(synk): mygame() env is unavailable; N_STATES / N_ACTIONS fixed here.
N_STATES = 32
N_ACTIONS = 4
H1 = 200            # logical fc1 width (as in the PyTorch module)
H2 = 400            # logical fc2 width
H1_PAD = 256        # lane-aligned padding of H1
H2_PAD = 512        # lane-aligned padding of H2
OUT_PAD = 128       # lane-dense padding of the N_ACTIONS output
BATCH = 256         # DQN minibatch per forward
NUM_NETS = 2        # eval net + target net fused into one pallas_call


def _tpu_generation():
    try:
        kind = jax.devices()[0].device_kind.lower()
    except Exception:
        return 0
    for gen in (7, 6, 5, 4, 3, 2):
        if f"v{gen}" in kind or f"tpu{gen}" in kind:
            return gen
    return 0


def _mlp_kernel(ew_dtype, x_ref, w1_ref, b1_ref, w2_ref, b2_ref, w3_ref,
                b3_ref, o_ref):
    # In-kernel f32 -> bf16 cast of the activation block (idle VALU slots).
    x = x_ref[...].astype(jnp.bfloat16)
    # fc1 + relu: bf16 MXU inputs, f32 accumulation, elementwise in ew_dtype.
    h1 = jnp.dot(x, w1_ref[0], preferred_element_type=jnp.float32)
    h1 = jnp.maximum(h1.astype(ew_dtype) + b1_ref[0].astype(ew_dtype), 0.0)
    # fc2 + relu
    h2 = jnp.dot(h1.astype(jnp.bfloat16), w2_ref[0],
                 preferred_element_type=jnp.float32)
    h2 = jnp.maximum(h2.astype(ew_dtype) + b2_ref[0].astype(ew_dtype), 0.0)
    # output layer: f32 bias add, bf16 cast on the lane-dense (unmasked) store.
    out = jnp.dot(h2.astype(jnp.bfloat16), w3_ref[0],
                  preferred_element_type=jnp.float32) + b3_ref[0]
    o_ref[0] = out.astype(o_ref.dtype)


def net_forward(x, stacked_params):
    """Fused forward of NUM_NETS stacked networks.

    x: (B, N_STATES) float32.
    stacked_params: (w1, b1, w2, b2, w3, b3); weights (NN, in, out) bf16
      (zero-padded), biases (NN, 1, out) float32 (zero-padded).
    Returns (NN, B, N_ACTIONS) float32.
    """
    w1, b1, w2, b2, w3, b3 = stacked_params
    nnets = w1.shape[0]
    B = x.shape[0]

    gen = _tpu_generation()
    # Elementwise dtype: bf16 on v6e/v7x (native bf16 VPU), f32 on v5e/older.
    ew_dtype = jnp.bfloat16 if gen >= 6 else jnp.float32
    # Batch tile: split across the 2 TensorCores only on v7x; a single block
    # on single-TC chips (no pointless sequential grid step).
    if gen >= 7 and B % 128 == 0 and B >= 256:
        tb, batch_sem = 128, "parallel"
    else:
        tb, batch_sem = B, "arbitrary"
    nb = B // tb

    # Per-network params: block is one network's (padded) tensor; index map
    # follows the network grid axis only (invariant across the batch axis).
    net_spec = lambda shape: pl.BlockSpec((1,) + tuple(shape[1:]),
                                          lambda i, n: (n, 0, 0))

    flops = 2 * nnets * B * (N_STATES * H1_PAD + H1_PAD * H2_PAD
                             + H2_PAD * OUT_PAD)
    bytes_accessed = int(x.size * x.dtype.itemsize
                         + sum(int(p.size) * p.dtype.itemsize
                               for p in stacked_params)
                         + nnets * B * OUT_PAD * 2)

    out_padded = pl.pallas_call(
        functools.partial(_mlp_kernel, ew_dtype),
        out_shape=jax.ShapeDtypeStruct((nnets, B, OUT_PAD), jnp.bfloat16),
        grid_spec=pltpu.PrefetchScalarGridSpec(
            num_scalar_prefetch=0,
            grid=(nb, nnets),
            in_specs=[
                pl.BlockSpec((tb, N_STATES), lambda i, n: (i, 0)),
                net_spec(w1.shape), net_spec(b1.shape),
                net_spec(w2.shape), net_spec(b2.shape),
                net_spec(w3.shape), net_spec(b3.shape),
            ],
            out_specs=pl.BlockSpec((1, tb, OUT_PAD), lambda i, n: (n, i, 0)),
        ),
        compiler_params=pltpu.CompilerParams(
            dimension_semantics=(batch_sem, "arbitrary")),
        cost_estimate=pl.CostEstimate(flops=flops, transcendentals=0,
                                      bytes_accessed=bytes_accessed),
    )(x, w1, b1, w2, b2, w3, b3)

    return out_padded[:, :, :N_ACTIONS].astype(jnp.float32)


def _init_single(key):
    k1, k2, k3, k4, k5, k6 = jax.random.split(key, 6)
    # Weights: normal(0, 0.1) as in the PyTorch module; stored (in, out).
    w1 = 0.1 * jax.random.normal(k1, (N_STATES, H1), jnp.float32)
    w2 = 0.1 * jax.random.normal(k2, (H1, H2), jnp.float32)
    w3 = 0.1 * jax.random.normal(k3, (H2, N_ACTIONS), jnp.float32)
    # Biases: PyTorch default nn.Linear init U(-1/sqrt(fan_in), 1/sqrt(fan_in)).
    b1 = jax.random.uniform(k4, (H1,), jnp.float32,
                            -1.0 / jnp.sqrt(N_STATES), 1.0 / jnp.sqrt(N_STATES))
    b2 = jax.random.uniform(k5, (H2,), jnp.float32,
                            -1.0 / jnp.sqrt(H1), 1.0 / jnp.sqrt(H1))
    b3 = jax.random.uniform(k6, (N_ACTIONS,), jnp.float32,
                            -1.0 / jnp.sqrt(H2), 1.0 / jnp.sqrt(H2))
    return w1, b1, w2, b2, w3, b3


def init_params(key, num_nets=NUM_NETS):
    """Returns (stacked padded params for the kernel, list of logical params)."""
    keys = jax.random.split(key, num_nets)
    logical = [_init_single(k) for k in keys]

    def pad2(a, shape):
        return jnp.zeros(shape, jnp.float32).at[:a.shape[0], :a.shape[1]].set(a)

    def padb(b, width):
        return jnp.zeros((1, width), jnp.float32).at[0, :b.shape[0]].set(b)

    w1s = jnp.stack([pad2(p[0], (N_STATES, H1_PAD)) for p in logical])
    b1s = jnp.stack([padb(p[1], H1_PAD) for p in logical])
    w2s = jnp.stack([pad2(p[2], (H1_PAD, H2_PAD)) for p in logical])
    b2s = jnp.stack([padb(p[3], H2_PAD) for p in logical])
    w3s = jnp.stack([pad2(p[4], (H2_PAD, OUT_PAD)) for p in logical])
    b3s = jnp.stack([padb(p[5], OUT_PAD) for p in logical])

    stacked = (w1s.astype(jnp.bfloat16), b1s,
               w2s.astype(jnp.bfloat16), b2s,
               w3s.astype(jnp.bfloat16), b3s)
    return stacked, logical


def reference_same_dataflow(x, stacked_params, ew_dtype):
    """Plain-JAX reference following the kernel's exact bf16/f32 dataflow."""
    w1, b1, w2, b2, w3, b3 = stacked_params
    xb = x.astype(jnp.bfloat16)
    outs = []
    for n in range(w1.shape[0]):
        h1 = jnp.dot(xb, w1[n], preferred_element_type=jnp.float32)
        h1 = jnp.maximum(h1.astype(ew_dtype) + b1[n].astype(ew_dtype), 0.0)
        h2 = jnp.dot(h1.astype(jnp.bfloat16), w2[n],
                     preferred_element_type=jnp.float32)
        h2 = jnp.maximum(h2.astype(ew_dtype) + b2[n].astype(ew_dtype), 0.0)
        o = jnp.dot(h2.astype(jnp.bfloat16), w3[n],
                    preferred_element_type=jnp.float32) + b3[n]
        outs.append(o.astype(jnp.bfloat16))
    return jnp.stack(outs)[:, :, :N_ACTIONS].astype(jnp.float32)


if __name__ == "__main__":
    key = jax.random.PRNGKey(0)
    pkey, xkey = jax.random.split(key)
    stacked_params, logical_params = init_params(pkey, NUM_NETS)
    x = jax.random.normal(xkey, (BATCH, N_STATES), jnp.float32)

    out = net_forward(x, stacked_params)
    out = jax.block_until_ready(out)
    assert out.shape == (NUM_NETS, BATCH, N_ACTIONS)

    # Exact-dataflow reference (same bf16 casts, f32 accumulation, bf16 store).
    gen = _tpu_generation()
    ew = jnp.bfloat16 if gen >= 6 else jnp.float32
    ref = reference_same_dataflow(x, stacked_params, ew)
    assert jnp.allclose(out, ref, atol=1e-2, rtol=1e-2)

    # Looser semantic check vs. the original full-f32 (unpadded) module math.
    for n, (w1, b1, w2, b2, w3, b3) in enumerate(logical_params):
        h = jnp.maximum(x @ w1 + b1, 0.0)
        h = jnp.maximum(h @ w2 + b2, 0.0)
        ref_f32 = h @ w3 + b3
        assert jnp.allclose(out[n], ref_f32, atol=0.25, rtol=0.1)

    print("KERNEL_OK")
</pallas_src>

<mosaic_0001>
module attributes {stable_mosaic.version = 11 : i64} {
  func.func @_mlp_kernel(%arg0: i32, %arg1: i32, %arg2: memref<256x32xf32, #tpu.memory_space<vmem>>, %arg3: memref<1x32x256xbf16, #tpu.memory_space<vmem>>, %arg4: memref<1x1x256xf32, #tpu.memory_space<vmem>>, %arg5: memref<1x256x512xbf16, #tpu.memory_space<vmem>>, %arg6: memref<1x1x512xf32, #tpu.memory_space<vmem>>, %arg7: memref<1x512x128xbf16, #tpu.memory_space<vmem>>, %arg8: memref<1x1x128xf32, #tpu.memory_space<vmem>>, %arg9: memref<1x256x128xbf16, #tpu.memory_space<vmem>>) attributes {dimension_semantics = [#tpu.dimension_semantics<arbitrary>, #tpu.dimension_semantics<arbitrary>], iteration_bounds = array<i64: 1, 2>, scalar_prefetch = 0 : i64, scratch_operands = 0 : i64, tpu.core_type = #tpu.core_type<tc>, window_params = [{transform_indices = @transform_0, window_bounds = array<i64: 256, 32>}, {transform_indices = @transform_1, window_bounds = array<i64: 1, 32, 256>}, {transform_indices = @transform_2, window_bounds = array<i64: 1, 1, 256>}, {transform_indices = @transform_3, window_bounds = array<i64: 1, 256, 512>}, {transform_indices = @transform_4, window_bounds = array<i64: 1, 1, 512>}, {transform_indices = @transform_5, window_bounds = array<i64: 1, 512, 128>}, {transform_indices = @transform_6, window_bounds = array<i64: 1, 1, 128>}, {transform_indices = @transform_7, window_bounds = array<i64: 1, 256, 128>}]} {
    %c0 = arith.constant 0 : index
    %c0_0 = arith.constant 0 : index
    %0 = vector.load %arg2[%c0, %c0_0] : memref<256x32xf32, #tpu.memory_space<vmem>>, vector<256x32xf32>
    %1 = arith.truncf %0 : vector<256x32xf32> to vector<256x32xbf16>
    %c0_1 = arith.constant 0 : index
    %c0_2 = arith.constant 0 : index
    %c0_3 = arith.constant 0 : index
    %2 = vector.load %arg3[%c0_1, %c0_2, %c0_3] : memref<1x32x256xbf16, #tpu.memory_space<vmem>>, vector<1x32x256xbf16>
    %3 = vector.shape_cast %2 : vector<1x32x256xbf16> to vector<32x256xbf16>
    %cst = arith.constant dense<0.000000e+00> : vector<256x256xf32>
    %4 = tpu.matmul %1, %3, %cst {dimension_numbers = #tpu.dot_dimension_numbers<[1], [0], [0], [1], [0, 0, 1, 1], [], []>} : vector<256x32xbf16>, vector<32x256xbf16>, vector<256x256xf32> -> vector<256x256xf32>
    %c0_4 = arith.constant 0 : index
    %c0_5 = arith.constant 0 : index
    %c0_6 = arith.constant 0 : index
    %5 = vector.load %arg4[%c0_4, %c0_5, %c0_6] : memref<1x1x256xf32, #tpu.memory_space<vmem>>, vector<1x1x256xf32>
    %6 = vector.shape_cast %5 : vector<1x1x256xf32> to vector<1x256xf32>
    %7 = vector.broadcast %6 : vector<1x256xf32> to vector<256x256xf32>
    %8 = arith.addf %4, %7 : vector<256x256xf32>
    %cst_7 = arith.constant 0.000000e+00 : f32
    %9 = vector.broadcast %cst_7 : f32 to vector<256x256xf32>
    %10 = arith.maximumf %8, %9 : vector<256x256xf32>
    %11 = arith.truncf %10 : vector<256x256xf32> to vector<256x256xbf16>
    %c0_8 = arith.constant 0 : index
    %c0_9 = arith.constant 0 : index
    %c0_10 = arith.constant 0 : index
    %12 = vector.load %arg5[%c0_8, %c0_9, %c0_10] : memref<1x256x512xbf16, #tpu.memory_space<vmem>>, vector<1x256x512xbf16>
    %13 = vector.shape_cast %12 : vector<1x256x512xbf16> to vector<256x512xbf16>
    %cst_11 = arith.constant dense<0.000000e+00> : vector<256x512xf32>
    %14 = tpu.matmul %11, %13, %cst_11 {dimension_numbers = #tpu.dot_dimension_numbers<[1], [0], [0], [1], [0, 0, 1, 1], [], []>} : vector<256x256xbf16>, vector<256x512xbf16>, vector<256x512xf32> -> vector<256x512xf32>
    %c0_12 = arith.constant 0 : index
    %c0_13 = arith.constant 0 : index
    %c0_14 = arith.constant 0 : index
    %15 = vector.load %arg6[%c0_12, %c0_13, %c0_14] : memref<1x1x512xf32, #tpu.memory_space<vmem>>, vector<1x1x512xf32>
    %16 = vector.shape_cast %15 : vector<1x1x512xf32> to vector<1x512xf32>
    %17 = vector.broadcast %16 : vector<1x512xf32> to vector<256x512xf32>
    %18 = arith.addf %14, %17 : vector<256x512xf32>
    %cst_15 = arith.constant 0.000000e+00 : f32
    %19 = vector.broadcast %cst_15 : f32 to vector<256x512xf32>
    %20 = arith.maximumf %18, %19 : vector<256x512xf32>
    %21 = arith.truncf %20 : vector<256x512xf32> to vector<256x512xbf16>
    %c0_16 = arith.constant 0 : index
    %c0_17 = arith.constant 0 : index
    %c0_18 = arith.constant 0 : index
    %22 = vector.load %arg7[%c0_16, %c0_17, %c0_18] : memref<1x512x128xbf16, #tpu.memory_space<vmem>>, vector<1x512x128xbf16>
    %23 = vector.shape_cast %22 : vector<1x512x128xbf16> to vector<512x128xbf16>
    %cst_19 = arith.constant dense<0.000000e+00> : vector<256x128xf32>
    %24 = tpu.matmul %21, %23, %cst_19 {dimension_numbers = #tpu.dot_dimension_numbers<[1], [0], [0], [1], [0, 0, 1, 1], [], []>} : vector<256x512xbf16>, vector<512x128xbf16>, vector<256x128xf32> -> vector<256x128xf32>
    %c0_20 = arith.constant 0 : index
    %c0_21 = arith.constant 0 : index
    %c0_22 = arith.constant 0 : index
    %25 = vector.load %arg8[%c0_20, %c0_21, %c0_22] : memref<1x1x128xf32, #tpu.memory_space<vmem>>, vector<1x1x128xf32>
    %26 = vector.shape_cast %25 : vector<1x1x128xf32> to vector<1x128xf32>
    %27 = vector.broadcast %26 : vector<1x128xf32> to vector<256x128xf32>
    %28 = arith.addf %24, %27 : vector<256x128xf32>
    %29 = arith.truncf %28 : vector<256x128xf32> to vector<256x128xbf16>
    %c0_23 = arith.constant 0 : index
    %c0_24 = arith.constant 0 : index
    %c0_25 = arith.constant 0 : index
    %30 = vector.load %arg9[%c0_23, %c0_24, %c0_25] : memref<1x256x128xbf16, #tpu.memory_space<vmem>>, vector<1x256x128xbf16>
    %31 = vector.shape_cast %30 : vector<1x256x128xbf16> to vector<256x128xbf16>
    %32 = vector.shape_cast %29 : vector<256x128xbf16> to vector<1x256x128xbf16>
    tpu.vector_store %arg9[%c0_23, %c0_24, %c0_25], %32 {strides = array<i32>} : memref<1x256x128xbf16, #tpu.memory_space<vmem>>, vector<1x256x128xbf16>,
    return
  }
  func.func @transform_0(%arg0: i32, %arg1: i32) -> (i32, i32) {
    %c0_i32 = arith.constant 0 : i32
    %c0_i32_0 = arith.constant 0 : i32
    return %arg0, %c0_i32 : i32, i32
  }
  func.func @transform_1(%arg0: i32, %arg1: i32) -> (i32, i32, i32) {
    %c0_i32 = arith.constant 0 : i32
    %c0_i32_0 = arith.constant 0 : i32
    %c0_i32_1 = arith.constant 0 : i32
    return %arg1, %c0_i32, %c0_i32_0 : i32, i32, i32
  }
  func.func @transform_2(%arg0: i32, %arg1: i32) -> (i32, i32, i32) {
    %c0_i32 = arith.constant 0 : i32
    %c0_i32_0 = arith.constant 0 : i32
    %c0_i32_1 = arith.constant 0 : i32
    return %arg1, %c0_i32, %c0_i32_0 : i32, i32, i32
  }
  func.func @transform_3(%arg0: i32, %arg1: i32) -> (i32, i32, i32) {
    %c0_i32 = arith.constant 0 : i32
    %c0_i32_0 = arith.constant 0 : i32
    %c0_i32_1 = arith.constant 0 : i32
    return %arg1, %c0_i32, %c0_i32_0 : i32, i32, i32
  }
  func.func @transform_4(%arg0: i32, %arg1: i32) -> (i32, i32, i32) {
    %c0_i32 = arith.constant 0 : i32
    %c0_i32_0 = arith.constant 0 : i32
    %c0_i32_1 = arith.constant 0 : i32
    return %arg1, %c0_i32, %c0_i32_0 : i32, i32, i32
  }
  func.func @transform_5(%arg0: i32, %arg1: i32) -> (i32, i32, i32) {
    %c0_i32 = arith.constant 0 : i32
    %c0_i32_0 = arith.constant 0 : i32
    %c0_i32_1 = arith.constant 0 : i32
    return %arg1, %c0_i32, %c0_i32_0 : i32, i32, i32
  }
  func.func @transform_6(%arg0: i32, %arg1: i32) -> (i32, i32, i32) {
    %c0_i32 = arith.constant 0 : i32
    %c0_i32_0 = arith.constant 0 : i32
    %c0_i32_1 = arith.constant 0 : i32
    return %arg1, %c0_i32, %c0_i32_0 : i32, i32, i32
  }
  func.func @transform_7(%arg0: i32, %arg1: i32) -> (i32, i32, i32) {
    %c0_i32 = arith.constant 0 : i32
    %c0_i32_0 = arith.constant 0 : i32
    return %arg1, %arg0, %c0_i32 : i32, i32, i32
  }
}

</mosaic_0001>

<llo_original>
// kernel: tpu_custom_call.1
$region0: #{tpu_custom_call.1}
  #allocation0 [shape = 'u32[]', space=smem, size = 0x4, offset = 0x4, fixed_abs, tag = 'smem constant byte address 0x4 - core index']
  #allocation1 [shape = 'u32[72,128]{1,0:T(1,128)}', space=vmem, size = 0x9000, scoped, tag = 'internal scratch']
  %s0 = inlined_call_operand.vmem [shape: f32[256,32], index: 0, kind: input, shape index: {}]
  %s1 = inlined_call_operand.vmem [shape: bf16[2,32,256], index: 1, kind: input, shape index: {}]
  %s2 = inlined_call_operand.vmem [shape: f32[2,1,256], index: 2, kind: input, shape index: {}]
  %s3 = inlined_call_operand.hbm [shape: bf16[2,256,512], index: 3, kind: input, shape index: {}]
  %s4 = inlined_call_operand.vmem [shape: f32[2,1,512], index: 4, kind: input, shape index: {}]
  %s5 = inlined_call_operand.hbm [shape: bf16[2,512,128], index: 5, kind: input, shape index: {}]
  %s6 = inlined_call_operand.vmem [shape: f32[2,1,128], index: 6, kind: input, shape index: {}]
  %s7 = inlined_call_operand.hbm [shape: bf16[2,256,128], index: 7, kind: output, shape index: {}]
  %s8 = sld [smem:[#allocation0]]
  $region69: #{tpu_custom_call.1} parent=0
    _
  %s10 = ssub.s32 1, %s8
  %s11 = scalar_select 0, %s10, %s8
  $region1: #{tpu_custom_call.1} parent=0
    #allocation2 [shape = 'u8[524288]{0}', space=vmem, size = 0x80000, scoped, tag = 'input window, operand 3']
    #allocation3 [shape = 's32[2]{0}', space=sflag, size = 0x8, scoped, tag = 'scoped memory for tpu_custom_call.1']
    #allocation4 [shape = 's32[2]{0}', space=sflag, size = 0x8, scoped, tag = 'scoped memory for tpu_custom_call.1']
    #allocation5 [shape = 'u8[262144]{0}', space=vmem, size = 0x40000, scoped, tag = 'input window, operand 5']
    #allocation6 [shape = 's32[2]{0}', space=sflag, size = 0x8, scoped, tag = 'scoped memory for tpu_custom_call.1']
    #allocation7 [shape = 'u8[131072]{0}', space=vmem, size = 0x20000, scoped, tag = 'output window, operand 0']
    %12 = vsyncpa [#allocation3], 0
    %s13 = scalar_lea.sflag [#allocation3], 1
    %14 = vsyncpa %s13, 0
    %15 = vsyncpa [#allocation6], 0
    %s16 = scalar_lea.sflag [#allocation6], 1
    %17 = vsyncpa %s16, 0
    %18 = vsyncpa [#allocation4], 0
    %s19 = scalar_lea.sflag [#allocation4], 1
    %20 = vsyncpa %s19, 0
    loop: start=0, step=1, limit=4
    $region2: #{tpu_custom_call.1} parent=1 // loop_pre_header
      _
    $region3: #{tpu_custom_call.1} parent=1 // loop_header
      %s22 = sphi 0, %s26
      %p23 = scmp.ge.s32.totalorder %s22, 4
      %s29 = sphi 0, %s41
      %s30 = sphi 0, %s37
      %s31 = sphi 0, %s29
      %s32 = sphi 0, %s30
      %s33 = sphi 0, %s31
      %s34 = sphi 0, %s32
      %s44 = sphi 0, %s46
      %s47 = sphi 0, %s44
      %s48 = sphi 0, %s47
      %s64 = sphi 0, %s48
      %s70 = sphi 0, %s72
      %s73 = sphi 0, %s70
      %s74 = sphi 0, %s73
      %s90 = sphi 0, %s74
      %s96 = sphi 0, %s98
      %s99 = sphi 0, %s96
      %s100 = sphi 0, %s99
      %s116 = sphi 0, %s100
      %s122 = sphi 0, %s124
      %s125 = sphi 0, %s122
      %s126 = sphi 0, %s125
      %s142 = sphi 0, %s126
      %s148 = sphi 0, %s150
      %s151 = sphi 0, %s148
      %s152 = sphi 0, %s151
      %s168 = sphi 0, %s152
      %s174 = sphi 0, %s176
      %s177 = sphi 0, %s174
      %s178 = sphi 0, %s177
      %s194 = sphi 0, %s178
      %s200 = sphi 0, %s202
      %s203 = sphi 0, %s200
      %s204 = sphi 0, %s203
      %s220 = sphi 0, %s204
      %s228 = sphi 0, %s230
      %s231 = sphi 0, %s228
      %s232 = sphi 0, %s231
      %s248 = sphi 0, %s232
    $region4: #{tpu_custom_call.1} parent=1 // loop_header_branch
      %25 = sbr.rel (%p23) target = $region8
    $region5: #{tpu_custom_call.1} parent=1 // loop_body
      %s27 = ssub.s32 %s22, 1
      %s28 = ssub.s32 %s22, 2
      %s35 = sadd.s32 1, %s30
      %p36 = scmp.ge.s32.totalorder %s35, 2
      %s37 = scalar_select %p36, 0, %s35
      %s38 = sadd.s32 1, %s29
      %s39 = scalar_select %p36, %s38, %s29
      %p40 = scmp.ge.s32.totalorder %s39, 1
      %s41 = scalar_select %p40, 0, %s39
      %s42 = ssub.s32 %s29, %s41
      %p43 = scmp.eq.s32.totalorder %s42, 0
      %s45 = sadd.s32 %s44, 1
      %s46 = scalar_select %p43, %s44, %s45
      %p49 = pneg %p43
      %p50 = scmp.eq.s32.totalorder %s22, 1
      %p51 = por %p49, %p50
      %p52 = scmp.ne.s32.totalorder %s44, %s47
      %p53 = scmp.eq.s32.totalorder %s22, 0
      %p54 = por %p52, %p53
      %p55 = scmp.ne.s32.totalorder %s44, %s47
      %p56 = scmp.eq.s32.totalorder %s27, 1
      %p57 = por %p55, %p56
      %p58 = scmp.ne.s32.totalorder %s47, %s48
      %p59 = scmp.eq.s32.totalorder %s27, 0
      %p60 = por %p58, %p59
      %p61 = scmp.ne.s32.totalorder %s47, %s48
      %p62 = scmp.eq.s32.totalorder %s28, 1
      %p63 = por %p61, %p62
      %p65 = scmp.ne.s32.totalorder %s48, %s64
      %p66 = scmp.eq.s32.totalorder %s28, 0
      %p67 = por %p65, %p66
      %s68 = ssub.s32 %s30, %s37
      %p69 = scmp.eq.s32.totalorder %s68, 0
      %s71 = sadd.s32 %s70, 1
      %s72 = scalar_select %p69, %s70, %s71
      %p75 = pneg %p69
      %p76 = scmp.eq.s32.totalorder %s22, 1
      %p77 = por %p75, %p76
      %p78 = scmp.ne.s32.totalorder %s70, %s73
      %p79 = scmp.eq.s32.totalorder %s22, 0
      %p80 = por %p78, %p79
      %p81 = scmp.ne.s32.totalorder %s70, %s73
      %p82 = scmp.eq.s32.totalorder %s27, 1
      %p83 = por %p81, %p82
      %p84 = scmp.ne.s32.totalorder %s73, %s74
      %p85 = scmp.eq.s32.totalorder %s27, 0
      %p86 = por %p84, %p85
      %p87 = scmp.ne.s32.totalorder %s73, %s74
      %p88 = scmp.eq.s32.totalorder %s28, 1
      %p89 = por %p87, %p88
      %p91 = scmp.ne.s32.totalorder %s74, %s90
      %p92 = scmp.eq.s32.totalorder %s28, 0
      %p93 = por %p91, %p92
      %s94 = ssub.s32 %s30, %s37
      %p95 = scmp.eq.s32.totalorder %s94, 0
      %s97 = sadd.s32 %s96, 1
      %s98 = scalar_select %p95, %s96, %s97
      %p101 = pneg %p95
      %p102 = scmp.eq.s32.totalorder %s22, 1
      %p103 = por %p101, %p102
      %p104 = scmp.ne.s32.totalorder %s96, %s99
      %p105 = scmp.eq.s32.totalorder %s22, 0
      %p106 = por %p104, %p105
      %p107 = scmp.ne.s32.totalorder %s96, %s99
      %p108 = scmp.eq.s32.totalorder %s27, 1
      %p109 = por %p107, %p108
      %p110 = scmp.ne.s32.totalorder %s99, %s100
      %p111 = scmp.eq.s32.totalorder %s27, 0
      %p112 = por %p110, %p111
      %p113 = scmp.ne.s32.totalorder %s99, %s100
      %p114 = scmp.eq.s32.totalorder %s28, 1
      %p115 = por %p113, %p114
      %p117 = scmp.ne.s32.totalorder %s100, %s116
      %p118 = scmp.eq.s32.totalorder %s28, 0
      %p119 = por %p117, %p118
      %s120 = ssub.s32 %s30, %s37
      %p121 = scmp.eq.s32.totalorder %s120, 0
      %s123 = sadd.s32 %s122, 1
      %s124 = scalar_select %p121, %s122, %s123
      %p127 = pneg %p121
      %p128 = scmp.eq.s32.totalorder %s22, 1
      %p129 = por %p127, %p128
      %p130 = scmp.ne.s32.totalorder %s122, %s125
      %p131 = scmp.eq.s32.totalorder %s22, 0
      %p132 = por %p130, %p131
      %p133 = scmp.ne.s32.totalorder %s122, %s125
      %p134 = scmp.eq.s32.totalorder %s27, 1
      %p135 = por %p133, %p134
      %p136 = scmp.ne.s32.totalorder %s125, %s126
      %p137 = scmp.eq.s32.totalorder %s27, 0
      %p138 = por %p136, %p137
      %p139 = scmp.ne.s32.totalorder %s125, %s126
      %p140 = scmp.eq.s32.totalorder %s28, 1
      %p141 = por %p139, %p140
      %p143 = scmp.ne.s32.totalorder %s126, %s142
      %p144 = scmp.eq.s32.totalorder %s28, 0
      %p145 = por %p143, %p144
      %s146 = ssub.s32 %s30, %s37
      %p147 = scmp.eq.s32.totalorder %s146, 0
      %s149 = sadd.s32 %s148, 1
      %s150 = scalar_select %p147, %s148, %s149
      %p153 = pneg %p147
      %p154 = scmp.eq.s32.totalorder %s22, 1
      %p155 = por %p153, %p154
      %p156 = scmp.ne.s32.totalorder %s148, %s151
      %p157 = scmp.eq.s32.totalorder %s22, 0
      %p158 = por %p156, %p157
      %p159 = scmp.ne.s32.totalorder %s148, %s151
      %p160 = scmp.eq.s32.totalorder %s27, 1
      %p161 = por %p159, %p160
      %p162 = scmp.ne.s32.totalorder %s151, %s152
      %p163 = scmp.eq.s32.totalorder %s27, 0
      %p164 = por %p162, %p163
      %p165 = scmp.ne.s32.totalorder %s151, %s152
      %p166 = scmp.eq.s32.totalorder %s28, 1
      %p167 = por %p165, %p166
      %p169 = scmp.ne.s32.totalorder %s152, %s168
      %p170 = scmp.eq.s32.totalorder %s28, 0
      %p171 = por %p169, %p170
      %s172 = ssub.s32 %s30, %s37
      %p173 = scmp.eq.s32.totalorder %s172, 0
      %s175 = sadd.s32 %s174, 1
      %s176 = scalar_select %p173, %s174, %s175
      %p179 = pneg %p173
      %p180 = scmp.eq.s32.totalorder %s22, 1
      %p181 = por %p179, %p180
      %p182 = scmp.ne.s32.totalorder %s174, %s177
      %p183 = scmp.eq.s32.totalorder %s22, 0
      %p184 = por %p182, %p183
      %p185 = scmp.ne.s32.totalorder %s174, %s177
      %p186 = scmp.eq.s32.totalorder %s27, 1
      %p187 = por %p185, %p186
      %p188 = scmp.ne.s32.totalorder %s177, %s178
      %p189 = scmp.eq.s32.totalorder %s27, 0
      %p190 = por %p188, %p189
      %p191 = scmp.ne.s32.totalorder %s177, %s178
      %p192 = scmp.eq.s32.totalorder %s28, 1
      %p193 = por %p191, %p192
      %p195 = scmp.ne.s32.totalorder %s178, %s194
      %p196 = scmp.eq.s32.totalorder %s28, 0
      %p197 = por %p195, %p196
      %s198 = ssub.s32 %s30, %s37
      %p199 = scmp.eq.s32.totalorder %s198, 0
      %s201 = sadd.s32 %s200, 1
      %s202 = scalar_select %p199, %s200, %s201
      %p205 = pneg %p199
      %p206 = scmp.eq.s32.totalorder %s22, 1
      %p207 = por %p205, %p206
      %p208 = scmp.ne.s32.totalorder %s200, %s203
      %p209 = scmp.eq.s32.totalorder %s22, 0
      %p210 = por %p208, %p209
      %p211 = scmp.ne.s32.totalorder %s200, %s203
      %p212 = scmp.eq.s32.totalorder %s27, 1
      %p213 = por %p211, %p212
      %p214 = scmp.ne.s32.totalorder %s203, %s204
      %p215 = scmp.eq.s32.totalorder %s27, 0
      %p216 = por %p214, %p215
      %p217 = scmp.ne.s32.totalorder %s203, %s204
      %p218 = scmp.eq.s32.totalorder %s28, 1
      %p219 = por %p217, %p218
      %p221 = scmp.ne.s32.totalorder %s204, %s220
      %p222 = scmp.eq.s32.totalorder %s28, 0
      %p223 = por %p221, %p222
      %s224 = ssub.s32 %s30, %s37
      %s225 = ssub.s32 %s29, %s41
      %s226 = sor.u32 %s224, %s225
      %p227 = scmp.eq.s32.totalorder %s226, 0
      %s229 = sadd.s32 %s228, 1
      %s230 = scalar_select %p227, %s228, %s229
      %p233 = pneg %p227
      %p234 = scmp.eq.s32.totalorder %s22, 1
      %p235 = por %p233, %p234
      %p236 = scmp.ne.s32.totalorder %s228, %s231
      %p237 = scmp.eq.s32.totalorder %s22, 0
      %p238 = por %p236, %p237
      %p239 = scmp.ne.s32.totalorder %s228, %s231
      %p240 = scmp.eq.s32.totalorder %s27, 1
      %p241 = por %p239, %p240
      %p242 = scmp.ne.s32.totalorder %s231, %s232
      %p243 = scmp.eq.s32.totalorder %s27, 0
      %p244 = por %p242, %p243
      %p245 = scmp.ne.s32.totalorder %s231, %s232
      %p246 = scmp.eq.s32.totalorder %s28, 1
      %p247 = por %p245, %p246
      %p249 = scmp.ne.s32.totalorder %s232, %s248
      %p250 = scmp.eq.s32.totalorder %s28, 0
      %p251 = por %p249, %p250
      %p252 = scmp.le.s32.totalorder 1, %s22
      %p253 = scmp.lt.s32.totalorder %s22, 3
      %p254 = pnand %p252, %p253
      %p255 = pneg %p254
      // Predicated region
      $region9: #{tpu_custom_call.1} parent=5 // pred_check
        _
      $region10: #{tpu_custom_call.1} parent=5 // pred_check_branch
        %257 = sbr.rel (%p254) target = $region12
      $region11: #{tpu_custom_call.1} parent=5 // pred_region
        %s258 = ssub.s32 %s22, 1
        // Predicated region
        $region13: #{tpu_custom_call.1} parent=11 // pred_check
          %p259 = pneg %p60
        $region14: #{tpu_custom_call.1} parent=11 // pred_check_branch
          %261 = sbr.rel (%p259) target = $region16
        $region15: #{tpu_custom_call.1} parent=11 // pred_region
          %s262 = smul.u32 32, %s31
          %p263 = scmp.lt.s32.totalorder %s262, 31
          %s264 = scalar_select %p263, %s262, 31
          %s265 = smul.addr %s264, 8
          %s266 = scalar_lea.vmem %s0, %s265
          %s267 = smul.u32 32, %s31
        $region16: #{tpu_custom_call.1} parent=11 // pred_fallthru
          _
      $region12: #{tpu_custom_call.1} parent=5 // pred_fallthru
        _
      %p268 = scmp.lt.s32.totalorder %s22, 2
      // Predicated region
      $region17: #{tpu_custom_call.1} parent=5 // pred_check
        %p269 = pneg %p268
      $region18: #{tpu_custom_call.1} parent=5 // pred_check_branch
        %271 = sbr.rel (%p269) target = $region20
      $region19: #{tpu_custom_call.1} parent=5 // pred_region
        // Predicated region
        $region21: #{tpu_custom_call.1} parent=19 // pred_check
          %p272 = pneg %p80
        $region22: #{tpu_custom_call.1} parent=19 // pred_check_branch
          %274 = sbr.rel (%p272) target = $region24
        $region23: #{tpu_custom_call.1} parent=19 // pred_region
          %p275 = scmp.lt.s32.totalorder %s30, 1
          %s276 = scalar_select %p275, %s30, 1
          %s277 = smul.addr %s276, 8
          %s278 = smul.addr %s277, 4
          %s279 = scalar_lea.vmem %s1, %s278
        $region24: #{tpu_custom_call.1} parent=19 // pred_fallthru
          _
        // Predicated region
        $region25: #{tpu_custom_call.1} parent=19 // pred_check
          %p280 = pneg %p106
        $region26: #{tpu_custom_call.1} parent=19 // pred_check_branch
          %282 = sbr.rel (%p280) target = $region28
        $region27: #{tpu_custom_call.1} parent=19 // pred_region
          %p283 = scmp.lt.s32.totalorder %s30, 1
          %s284 = scalar_select %p283, %s30, 1
          %s285 = smul.addr %s284, 2
          %s286 = scalar_lea.vmem %s2, %s285
        $region28: #{tpu_custom_call.1} parent=19 // pred_fallthru
          _
        // Predicated region
        $region29: #{tpu_custom_call.1} parent=19 // pred_check
          %p287 = pneg %p132
        $region30: #{tpu_custom_call.1} parent=19 // pred_check_branch
          %289 = sbr.rel (%p287) target = $region32
        $region31: #{tpu_custom_call.1} parent=19 // pred_region
          %s290 = sand.u32 %s122, 1
          %s291 = scalar_lea.sflag [#allocation3], %s290
          %s292 = sand.u32 %s122, 1
          %s293 = smul.addr %s292, 512
          %s294 = scalar_lea.vmem [#allocation2], %s293
          %296 = vsyncadd %s291, 0
          %s297 = smul.addr %s30, 128
          %s298 = smul.addr %s297, 4
          %s299 = scalar_lea.hbm %s3, %s298
          %s300 = sshll.u32 %s299, 4
          %s301 = int_to_ptr.hbm [resolvable:$true] %s300
          %s302 = sshll.u32 %s294, 4
          %s303 = int_to_ptr.vmem [resolvable:$true] %s302
          %308 = dma.hbm_to_vmem [thread:$0]  %s301, 8192, %s303, %s291, 256, 256, 16
        $region32: #{tpu_custom_call.1} parent=19 // pred_fallthru
          _
        // Predicated region
        $region33: #{tpu_custom_call.1} parent=19 // pred_check
          %p309 = pneg %p158
        $region34: #{tpu_custom_call.1} parent=19 // pred_check_branch
          %311 = sbr.rel (%p309) target = $region36
        $region35: #{tpu_custom_call.1} parent=19 // pred_region
          %p312 = scmp.lt.s32.totalorder %s30, 1
          %s313 = scalar_select %p312, %s30, 1
          %s314 = smul.addr %s313, 4
          %s315 = scalar_lea.vmem %s4, %s314
        $region36: #{tpu_custom_call.1} parent=19 // pred_fallthru
          _
        // Predicated region
        $region37: #{tpu_custom_call.1} parent=19 // pred_check
          %p316 = pneg %p184
        $region38: #{tpu_custom_call.1} parent=19 // pred_check_branch
          %318 = sbr.rel (%p316) target = $region40
        $region39: #{tpu_custom_call.1} parent=19 // pred_region
          %s319 = sand.u32 %s174, 1
          %s320 = scalar_lea.sflag [#allocation6], %s319
          %s321 = sand.u32 %s174, 1
          %s322 = smul.addr %s321, 256
          %s323 = scalar_lea.vmem [#allocation5], %s322
          %325 = vsyncadd %s320, 0
          %s326 = smul.addr %s30, 64
          %s327 = smul.addr %s326, 4
          %s328 = scalar_lea.hbm %s5, %s327
          %s329 = sshll.u32 %s328, 4
          %s330 = int_to_ptr.hbm [resolvable:$true] %s329
          %s331 = sshll.u32 %s323, 4
          %s332 = int_to_ptr.vmem [resolvable:$true] %s331
          %337 = dma.hbm_to_vmem [thread:$0]  %s330, 4096, %s332, %s320, 64, 64, 4
        $region40: #{tpu_custom_call.1} parent=19 // pred_fallthru
          _
        // Predicated region
        $region41: #{tpu_custom_call.1} parent=19 // pred_check
          %p338 = pneg %p210
        $region42: #{tpu_custom_call.1} parent=19 // pred_check_branch
          %340 = sbr.rel (%p338) target = $region44
        $region43: #{tpu_custom_call.1} parent=19 // pred_region
          %p341 = scmp.lt.s32.totalorder %s30, 1
          %s342 = scalar_select %p341, %s30, 1
          %s343 = scalar_lea.vmem %s6, %s342
        $region44: #{tpu_custom_call.1} parent=19 // pred_fallthru
          _
      $region20: #{tpu_custom_call.1} parent=5 // pred_fallthru
        _
      %p344 = scmp.le.s32.totalorder 1, %s22
      %p345 = scmp.lt.s32.totalorder %s22, 3
      %p346 = pnand %p344, %p345
      %p347 = pneg %p346
      // Predicated region
      $region45: #{tpu_custom_call.1} parent=5 // pred_check
        _
      $region46: #{tpu_custom_call.1} parent=5 // pred_check_branch
        %349 = sbr.rel (%p346) target = $region48
      $region47: #{tpu_custom_call.1} parent=5 // pred_region
        %s350 = ssub.s32 %s22, 1
        %s351 = sand.u32 %s125, 1
        %s352 = scalar_lea.sflag [#allocation3], %s351
        %s353 = sand.u32 %s125, 1
        %s354 = smul.addr %s353, 512
        %s355 = scalar_lea.vmem [#allocation2], %s354
        // Predicated region
        $region49: #{tpu_custom_call.1} parent=47 // pred_check
          %p356 = pneg %p138
        $region50: #{tpu_custom_call.1} parent=47 // pred_check_branch
          %358 = sbr.rel (%p356) target = $region52
        $region51: #{tpu_custom_call.1} parent=47 // pred_region
          %360 = dma.done %s352, 8192
        $region52: #{tpu_custom_call.1} parent=47 // pred_fallthru
          _
        %s361 = sand.u32 %s177, 1
        %s362 = scalar_lea.sflag [#allocation6], %s361
        %s363 = sand.u32 %s177, 1
        %s364 = smul.addr %s363, 256
        %s365 = scalar_lea.vmem [#allocation5], %s364
        // Predicated region
        $region53: #{tpu_custom_call.1} parent=47 // pred_check
          %p366 = pneg %p190
        $region54: #{tpu_custom_call.1} parent=47 // pred_check_branch
          %368 = sbr.rel (%p366) target = $region56
        $region55: #{tpu_custom_call.1} parent=47 // pred_region
          %370 = dma.done %s362, 4096
        $region56: #{tpu_custom_call.1} parent=47 // pred_fallthru
          _
        %s371 = smul.u32 32, %s31
        %p372 = scmp.lt.s32.totalorder %s371, 31
        %s373 = scalar_select %p372, %s371, 31
        %s374 = smul.addr %s373, 8
        %s375 = scalar_lea.vmem %s0, %s374
        %p376 = pneg %p60
        %p377 = pneg %p57
        %p378 = scmp.lt.s32.totalorder %s32, 1
        %s379 = scalar_select %p378, %s32, 1
        %s380 = smul.addr %s379, 8
        %s381 = smul.addr %s380, 4
        %s382 = scalar_lea.vmem %s1, %s381
        %p383 = pneg %p86
        %p384 = pneg %p83
        %p385 = scmp.lt.s32.totalorder %s32, 1
        %s386 = scalar_select %p385, %s32, 1
        %s387 = smul.addr %s386, 2
        %s388 = scalar_lea.vmem %s2, %s387
        %p389 = pneg %p112
        %p390 = pneg %p109
        %s391 = sand.u32 %s125, 1
        %s392 = scalar_lea.sflag [#allocation3], %s391
        %s393 = sand.u32 %s125, 1
        %s394 = smul.addr %s393, 512
        %s395 = scalar_lea.vmem [#allocation2], %s394
        %p396 = pneg %p138
        %p397 = pneg %p135
        %p398 = scmp.lt.s32.totalorder %s32, 1
        %s399 = scalar_select %p398, %s32, 1
        %s400 = smul.addr %s399, 4
        %s401 = scalar_lea.vmem %s4, %s400
        %p402 = pneg %p164
        %p403 = pneg %p161
        %s404 = sand.u32 %s177, 1
        %s405 = scalar_lea.sflag [#allocation6], %s404
        %s406 = sand.u32 %s177, 1
        %s407 = smul.addr %s406, 256
        %s408 = scalar_lea.vmem [#allocation5], %s407
        %p409 = pneg %p190
        %p410 = pneg %p187
        %p411 = scmp.lt.s32.totalorder %s32, 1
        %s412 = scalar_select %p411, %s32, 1
        %s413 = scalar_lea.vmem %s6, %s412
        %p414 = pneg %p216
        %p415 = pneg %p213
        %p416 = pneg %p244
        %p417 = pneg %p241
        %s418 = sand.u32 %s231, 1
        %s419 = scalar_lea.sflag [#allocation4], %s418
        %s420 = sand.u32 %s231, 1
        %s421 = smul.addr %s420, 128
        %s422 = scalar_lea.vmem [#allocation7], %s421
        %s423 = smul.u32 32, %s31
        %p424 = scmp.lt.s32.totalorder %s423, 31
        %s425 = scalar_select %p424, %s423, 31
        %s426 = smul.addr %s425, 8
        %s427 = scalar_lea.vmem %s0, %s426
        %s428 = smul.u32 32, %s31
        %p429 = scmp.lt.s32.totalorder %s32, 1
        %s430 = scalar_select %p429, %s32, 1
        %s431 = smul.addr %s430, 8
        %s432 = smul.addr %s431, 4
        %s433 = scalar_lea.vmem %s1, %s432
        %p434 = scmp.lt.s32.totalorder %s32, 1
        %s435 = scalar_select %p434, %s32, 1
        %s436 = smul.addr %s435, 2
        %s437 = scalar_lea.vmem %s2, %s436
        %p438 = scmp.lt.s32.totalorder %s32, 1
        %s439 = scalar_select %p438, %s32, 1
        %s440 = smul.addr %s439, 4
        %s441 = scalar_lea.vmem %s4, %s440
        %p442 = scmp.lt.s32.totalorder %s32, 1
        %s443 = scalar_select %p442, %s32, 1
        %s444 = scalar_lea.vmem %s6, %s443
        %s445 = smul.u32 32, %s31
        %v447 = vld [vmem:[%s427] sm:$0xff]
        %v448 = vld [vmem:[%s427 + $0x8] sm:$0xff]
        %v449 = vld [vmem:[%s427 + $0x10] sm:$0xff]
        %v450 = vld [vmem:[%s427 + $0x18] sm:$0xff]
        %v451 = vld [vmem:[%s427 + $0x20] sm:$0xff]
        %v452 = vld [vmem:[%s427 + $0x28] sm:$0xff]
        %v453 = vld [vmem:[%s427 + $0x30] sm:$0xff]
        %v454 = vld [vmem:[%s427 + $0x38] sm:$0xff]
        %v455 = vld [vmem:[%s427 + $0x40] sm:$0xff]
        %v456 = vld [vmem:[%s427 + $0x48] sm:$0xff]
        %v457 = vld [vmem:[%s427 + $0x50] sm:$0xff]
        %v458 = vld [vmem:[%s427 + $0x58] sm:$0xff]
        %v459 = vld [vmem:[%s427 + $0x60] sm:$0xff]
        %v460 = vld [vmem:[%s427 + $0x68] sm:$0xff]
        %v461 = vld [vmem:[%s427 + $0x70] sm:$0xff]
        %v462 = vld [vmem:[%s427 + $0x78] sm:$0xff]
        %v463 = vld [vmem:[%s427 + $0x80] sm:$0xff]
        %v464 = vld [vmem:[%s427 + $0x88] sm:$0xff]
        %v465 = vld [vmem:[%s427 + $0x90] sm:$0xff]
        %v466 = vld [vmem:[%s427 + $0x98] sm:$0xff]
        %v467 = vld [vmem:[%s427 + $0xa0] sm:$0xff]
        %v468 = vld [vmem:[%s427 + $0xa8] sm:$0xff]
        %v469 = vld [vmem:[%s427 + $0xb0] sm:$0xff]
        %v470 = vld [vmem:[%s427 + $0xb8] sm:$0xff]
        %v471 = vld [vmem:[%s427 + $0xc0] sm:$0xff]
        %v472 = vld [vmem:[%s427 + $0xc8] sm:$0xff]
        %v473 = vld [vmem:[%s427 + $0xd0] sm:$0xff]
        %v474 = vld [vmem:[%s427 + $0xd8] sm:$0xff]
        %v475 = vld [vmem:[%s427 + $0xe0] sm:$0xff]
        %v476 = vld [vmem:[%s427 + $0xe8] sm:$0xff]
        %v477 = vld [vmem:[%s427 + $0xf0] sm:$0xff]
        %v478 = vld [vmem:[%s427 + $0xf8] sm:$0xff]
        %v479 = vpack.c.bf16 %v448, %v447
        %v480 = vpack.c.bf16 %v450, %v449
        %v481 = vpack.c.bf16 %v452, %v451
        %v482 = vpack.c.bf16 %v454, %v453
        %v483 = vpack.c.bf16 %v456, %v455
        %v484 = vpack.c.bf16 %v458, %v457
        %v485 = vpack.c.bf16 %v460, %v459
        %v486 = vpack.c.bf16 %v462, %v461
        %v487 = vpack.c.bf16 %v464, %v463
        %v488 = vpack.c.bf16 %v466, %v465
        %v489 = vpack.c.bf16 %v468, %v467
        %v490 = vpack.c.bf16 %v470, %v469
        %v491 = vpack.c.bf16 %v472, %v471
        %v492 = vpack.c.bf16 %v474, %v473
        %v493 = vpack.c.bf16 %v476, %v475
        %v494 = vpack.c.bf16 %v478, %v477
        %v495 = vld [vmem:[%s433] sm:$0xff]
        %v496 = vld [vmem:[%s433 + $0x8] sm:$0xff]
        %v497 = vld [vmem:[%s433 + $0x10] sm:$0xff]
        %v498 = vld [vmem:[%s433 + $0x18] sm:$0xff]
        %v499 = vld [vmem:[%s437] sm:$0x3]
        %v501 = vperm.slane %v499, 0
        %v502 = vperm.slane %v499, 1
        %v509 = vunpack.c.l.b16 %v495
        %v510 = vunpack.c.h.b16 %v495
        %v511 = vunpack.c.l.b16 %v496
        %v512 = vunpack.c.h.b16 %v496
        %v513 = vunpack.c.l.b16 %v497
        %v514 = vunpack.c.h.b16 %v497
        %v515 = vunpack.c.l.b16 %v498
        %v516 = vunpack.c.h.b16 %v498
        %v517 = vpack.c.b16 %v511, %v509
        %v518 = vpack.c.b16 %v512, %v510
        %v519 = vpack.c.b16 %v515, %v513
        %v520 = vpack.c.b16 %v516, %v514
        %vm525 = vcmask 261120
        %v527 = vsel %vm525, %v479, 0
        %v530 = vsel %vm525, %v480, 0
        %v533 = vsel %vm525, %v481, 0
        %v536 = vsel %vm525, %v482, 0
        %v539 = vsel %vm525, %v483, 0
        %v542 = vsel %vm525, %v484, 0
        %v545 = vsel %vm525, %v485, 0
        %v548 = vsel %vm525, %v486, 0
        %v551 = vsel %vm525, %v487, 0
        %v554 = vsel %vm525, %v488, 0
        %v557 = vsel %vm525, %v489, 0
        %v560 = vsel %vm525, %v490, 0
        %v563 = vsel %vm525, %v491, 0
        %v566 = vsel %vm525, %v492, 0
        %v569 = vsel %vm525, %v493, 0
        %v572 = vsel %vm525, %v494, 0
        %574 = vmatpush.bf16.msra.mxu0 0
        %575 = vmatpush.bf16.msra.mxu0 0
        %576 = vmatpush.bf16.msra.mxu0 0
        %577 = vmatpush.bf16.msra.mxu0 0
        %578 = vmatpush.bf16.msra.mxu0 0
        %579 = vmatpush.bf16.msra.mxu0 0
        %580 = vmatpush.bf16.msra.mxu0 %v519
        %581 = vmatpush.bf16.msra.mxu0 %v517
        %582 = vmatmul.bf16.gmra.mxu0 %v527
        %v583 = vpop.f32.mrf.mxu0
        %v584 = vadd.f32 %v501, %v583
        %v585 = vpop.f32.mrf.mxu0
        %v586 = vadd.f32 %v501, %v585
        %587 = vmatmul.bf16.gmra.mxu0 %v530
        %v588 = vpop.f32.mrf.mxu0
        %v589 = vadd.f32 %v501, %v588
        %v590 = vpop.f32.mrf.mxu0
        %v591 = vadd.f32 %v501, %v590
        %592 = vmatmul.bf16.gmra.mxu0 %v533
        %v593 = vpop.f32.mrf.mxu0
        %v594 = vadd.f32 %v501, %v593
        %v595 = vpop.f32.mrf.mxu0
        %v596 = vadd.f32 %v501, %v595
        %597 = vmatmul.bf16.gmra.mxu0 %v536
        %v598 = vpop.f32.mrf.mxu0
        %v599 = vadd.f32 %v501, %v598
        %v600 = vpop.f32.mrf.mxu0
        %v601 = vadd.f32 %v501, %v600
        %602 = vmatmul.bf16.gmra.mxu0 %v539
        %v603 = vpop.f32.mrf.mxu0
        %v604 = vadd.f32 %v501, %v603
        %v605 = vpop.f32.mrf.mxu0
        %v606 = vadd.f32 %v501, %v605
        %607 = vmatmul.bf16.gmra.mxu0 %v542
        %v608 = vpop.f32.mrf.mxu0
        %v609 = vadd.f32 %v501, %v608
        %v610 = vpop.f32.mrf.mxu0
        %v611 = vadd.f32 %v501, %v610
        %612 = vmatmul.bf16.gmra.mxu0 %v545
        %v613 = vpop.f32.mrf.mxu0
        %v614 = vadd.f32 %v501, %v613
        %v615 = vpop.f32.mrf.mxu0
        %v616 = vadd.f32 %v501, %v615
        %617 = vmatmul.bf16.gmra.mxu0 %v548
        %v618 = vpop.f32.mrf.mxu0
        %v619 = vadd.f32 %v501, %v618
        %v620 = vpop.f32.mrf.mxu0
        %v621 = vadd.f32 %v501, %v620
        %622 = vmatmul.bf16.gmra.mxu0 %v551
        %v623 = vpop.f32.mrf.mxu0
        %v624 = vadd.f32 %v501, %v623
        %v625 = vpop.f32.mrf.mxu0
        %v626 = vadd.f32 %v501, %v625
        %627 = vmatmul.bf16.gmra.mxu0 %v554
        %v628 = vpop.f32.mrf.mxu0
        %v629 = vadd.f32 %v501, %v628
        %v630 = vpop.f32.mrf.mxu0
        %v631 = vadd.f32 %v501, %v630
        %632 = vmatmul.bf16.gmra.mxu0 %v557
        %v633 = vpop.f32.mrf.mxu0
        %v634 = vadd.f32 %v501, %v633
        %v635 = vpop.f32.mrf.mxu0
        %v636 = vadd.f32 %v501, %v635
        %637 = vmatmul.bf16.gmra.mxu0 %v560
        %v638 = vpop.f32.mrf.mxu0
        %v639 = vadd.f32 %v501, %v638
        %v640 = vpop.f32.mrf.mxu0
        %v641 = vadd.f32 %v501, %v640
        %642 = vmatmul.bf16.gmra.mxu0 %v563
        %v643 = vpop.f32.mrf.mxu0
        %v644 = vadd.f32 %v501, %v643
        %v645 = vpop.f32.mrf.mxu0
        %v646 = vadd.f32 %v501, %v645
        %647 = vmatmul.bf16.gmra.mxu0 %v566
        %v648 = vpop.f32.mrf.mxu0
        %v649 = vadd.f32 %v501, %v648
        %v650 = vpop.f32.mrf.mxu0
        %v651 = vadd.f32 %v501, %v650
        %652 = vmatmul.bf16.gmra.mxu0 %v569
        %v653 = vpop.f32.mrf.mxu0
        %v654 = vadd.f32 %v501, %v653
        %v655 = vpop.f32.mrf.mxu0
        %v656 = vadd.f32 %v501, %v655
        %657 = vmatmul.bf16.gmra.mxu0 %v572
        %v658 = vpop.f32.mrf.mxu0
        %v659 = vadd.f32 %v501, %v658
        %v660 = vpop.f32.mrf.mxu0
        %v661 = vadd.f32 %v501, %v660
        %662 = vdwg.mxu0
        %663 = vmatpush.bf16.msra.mxu0 0
        %664 = vmatpush.bf16.msra.mxu0 0
        %665 = vmatpush.bf16.msra.mxu0 0
        %666 = vmatpush.bf16.msra.mxu0 0
        %667 = vmatpush.bf16.msra.mxu0 0
        %668 = vmatpush.bf16.msra.mxu0 0
        %669 = vmatpush.bf16.msra.mxu0 %v520
        %670 = vmatpush.bf16.msra.mxu0 %v518
        %671 = vmatmul.bf16.gmra.mxu0 %v527
        %v672 = vpop.f32.mrf.mxu0
        %v673 = vadd.f32 %v502, %v672
        %v674 = vpop.f32.mrf.mxu0
        %v675 = vadd.f32 %v502, %v674
        %676 = vmatmul.bf16.gmra.mxu0 %v530
        %v677 = vpop.f32.mrf.mxu0
        %v678 = vadd.f32 %v502, %v677
        %v679 = vpop.f32.mrf.mxu0
        %v680 = vadd.f32 %v502, %v679
        %681 = vmatmul.bf16.gmra.mxu0 %v533
        %v682 = vpop.f32.mrf.mxu0
        %v683 = vadd.f32 %v502, %v682
        %v684 = vpop.f32.mrf.mxu0
        %v685 = vadd.f32 %v502, %v684
        %686 = vmatmul.bf16.gmra.mxu0 %v536
        %v687 = vpop.f32.mrf.mxu0
        %v688 = vadd.f32 %v502, %v687
        %v689 = vpop.f32.mrf.mxu0
        %v690 = vadd.f32 %v502, %v689
        %691 = vmatmul.bf16.gmra.mxu0 %v539
        %v692 = vpop.f32.mrf.mxu0
        %v693 = vadd.f32 %v502, %v692
        %v694 = vpop.f32.mrf.mxu0
        %v695 = vadd.f32 %v502, %v694
        %696 = vmatmul.bf16.gmra.mxu0 %v542
        %v697 = vpop.f32.mrf.mxu0
        %v698 = vadd.f32 %v502, %v697
        %v699 = vpop.f32.mrf.mxu0
        %v700 = vadd.f32 %v502, %v699
        %701 = vmatmul.bf16.gmra.mxu0 %v545
        %v702 = vpop.f32.mrf.mxu0
        %v703 = vadd.f32 %v502, %v702
        %v704 = vpop.f32.mrf.mxu0
        %v705 = vadd.f32 %v502, %v704
        %706 = vmatmul.bf16.gmra.mxu0 %v548
        %v707 = vpop.f32.mrf.mxu0
        %v708 = vadd.f32 %v502, %v707
        %v709 = vpop.f32.mrf.mxu0
        %v710 = vadd.f32 %v502, %v709
        %711 = vmatmul.bf16.gmra.mxu0 %v551
        %v712 = vpop.f32.mrf.mxu0
        %v713 = vadd.f32 %v502, %v712
        %v714 = vpop.f32.mrf.mxu0
        %v715 = vadd.f32 %v502, %v714
        %716 = vmatmul.bf16.gmra.mxu0 %v554
        %v717 = vpop.f32.mrf.mxu0
        %v718 = vadd.f32 %v502, %v717
        %v719 = vpop.f32.mrf.mxu0
        %v720 = vadd.f32 %v502, %v719
        %721 = vmatmul.bf16.gmra.mxu0 %v557
        %v722 = vpop.f32.mrf.mxu0
        %v723 = vadd.f32 %v502, %v722
        %v724 = vpop.f32.mrf.mxu0
        %v725 = vadd.f32 %v502, %v724
        %726 = vmatmul.bf16.gmra.mxu0 %v560
        %v727 = vpop.f32.mrf.mxu0
        %v728 = vadd.f32 %v502, %v727
        %v729 = vpop.f32.mrf.mxu0
        %v730 = vadd.f32 %v502, %v729
        %731 = vmatmul.bf16.gmra.mxu0 %v563
        %v732 = vpop.f32.mrf.mxu0
        %v733 = vadd.f32 %v502, %v732
        %v734 = vpop.f32.mrf.mxu0
        %v735 = vadd.f32 %v502, %v734
        %736 = vmatmul.bf16.gmra.mxu0 %v566
        %v737 = vpop.f32.mrf.mxu0
        %v738 = vadd.f32 %v502, %v737
        %v739 = vpop.f32.mrf.mxu0
        %v740 = vadd.f32 %v502, %v739
        %741 = vmatmul.bf16.gmra.mxu0 %v569
        %v742 = vpop.f32.mrf.mxu0
        %v743 = vadd.f32 %v502, %v742
        %v744 = vpop.f32.mrf.mxu0
        %v745 = vadd.f32 %v502, %v744
        %746 = vmatmul.bf16.gmra.mxu0 %v572
        %v747 = vpop.f32.mrf.mxu0
        %v748 = vadd.f32 %v502, %v747
        %v749 = vpop.f32.mrf.mxu0
        %v750 = vadd.f32 %v502, %v749
        %751 = vdwg.mxu0
        %v752 = vmax.f32 %v584, 0.0
        %v753 = vmax.f32 %v673, 0.0
        %v754 = vmax.f32 %v586, 0.0
        %v755 = vmax.f32 %v675, 0.0
        %v756 = vmax.f32 %v589, 0.0
        %v757 = vmax.f32 %v678, 0.0
        %v758 = vmax.f32 %v591, 0.0
        %v759 = vmax.f32 %v680, 0.0
        %v760 = vmax.f32 %v594, 0.0
        %v761 = vmax.f32 %v683, 0.0
        %v762 = vmax.f32 %v596, 0.0
        %v763 = vmax.f32 %v685, 0.0
        %v764 = vmax.f32 %v599, 0.0
        %v765 = vmax.f32 %v688, 0.0
        %v766 = vmax.f32 %v601, 0.0
        %v767 = vmax.f32 %v690, 0.0
        %v768 = vmax.f32 %v604, 0.0
        %v769 = vmax.f32 %v693, 0.0
        %v770 = vmax.f32 %v606, 0.0
        %v771 = vmax.f32 %v695, 0.0
        %v772 = vmax.f32 %v609, 0.0
        %v773 = vmax.f32 %v698, 0.0
        %v774 = vmax.f32 %v611, 0.0
        %v775 = vmax.f32 %v700, 0.0
        %v776 = vmax.f32 %v614, 0.0
        %v777 = vmax.f32 %v703, 0.0
        %v778 = vmax.f32 %v616, 0.0
        %v779 = vmax.f32 %v705, 0.0
        %v780 = vmax.f32 %v619, 0.0
        %v781 = vmax.f32 %v708, 0.0
        %v782 = vmax.f32 %v621, 0.0
        %v783 = vmax.f32 %v710, 0.0
        %v784 = vmax.f32 %v624, 0.0
        %v785 = vmax.f32 %v713, 0.0
        %v786 = vmax.f32 %v626, 0.0
        %v787 = vmax.f32 %v715, 0.0
        %v788 = vmax.f32 %v629, 0.0
        %v789 = vmax.f32 %v718, 0.0
        %v790 = vmax.f32 %v631, 0.0
        %v791 = vmax.f32 %v720, 0.0
        %v792 = vmax.f32 %v634, 0.0
        %v793 = vmax.f32 %v723, 0.0
        %v794 = vmax.f32 %v636, 0.0
        %v795 = vmax.f32 %v725, 0.0
        %v796 = vmax.f32 %v639, 0.0
        %v797 = vmax.f32 %v728, 0.0
        %v798 = vmax.f32 %v641, 0.0
        %v799 = vmax.f32 %v730, 0.0
        %v800 = vmax.f32 %v644, 0.0
        %v801 = vmax.f32 %v733, 0.0
        %v802 = vmax.f32 %v646, 0.0
        %v803 = vmax.f32 %v735, 0.0
        %v804 = vmax.f32 %v649, 0.0
        %v805 = vmax.f32 %v738, 0.0
        %v806 = vmax.f32 %v651, 0.0
        %v807 = vmax.f32 %v740, 0.0
        %v808 = vmax.f32 %v654, 0.0
        %v809 = vmax.f32 %v743, 0.0
        %v810 = vmax.f32 %v656, 0.0
        %v811 = vmax.f32 %v745, 0.0
        %v812 = vmax.f32 %v659, 0.0
        %v813 = vmax.f32 %v748, 0.0
        %v814 = vmax.f32 %v661, 0.0
        %v815 = vmax.f32 %v750, 0.0
        %v816 = vpack.c.bf16 %v754, %v752
        %v817 = vpack.c.bf16 %v755, %v753
        %v818 = vpack.c.bf16 %v758, %v756
        %v819 = vpack.c.bf16 %v759, %v757
        %v820 = vpack.c.bf16 %v762, %v760
        %v821 = vpack.c.bf16 %v763, %v761
        %v822 = vpack.c.bf16 %v766, %v764
        %v823 = vpack.c.bf16 %v767, %v765
        %v824 = vpack.c.bf16 %v770, %v768
        %v825 = vpack.c.bf16 %v771, %v769
        %v826 = vpack.c.bf16 %v774, %v772
        %v827 = vpack.c.bf16 %v775, %v773
        %v828 = vpack.c.bf16 %v778, %v776
        %v829 = vpack.c.bf16 %v779, %v777
        %v830 = vpack.c.bf16 %v782, %v780
        %v831 = vpack.c.bf16 %v783, %v781
        %v832 = vpack.c.bf16 %v786, %v784
        %v833 = vpack.c.bf16 %v787, %v785
        %v834 = vpack.c.bf16 %v790, %v788
        %v835 = vpack.c.bf16 %v791, %v789
        %v836 = vpack.c.bf16 %v794, %v792
        %v837 = vpack.c.bf16 %v795, %v793
        %v838 = vpack.c.bf16 %v798, %v796
        %v839 = vpack.c.bf16 %v799, %v797
        %v840 = vpack.c.bf16 %v802, %v800
        %v841 = vpack.c.bf16 %v803, %v801
        %v842 = vpack.c.bf16 %v806, %v804
        %v843 = vpack.c.bf16 %v807, %v805
        %v844 = vpack.c.bf16 %v810, %v808
        %v845 = vpack.c.bf16 %v811, %v809
        %v846 = vpack.c.bf16 %v814, %v812
        %v847 = vpack.c.bf16 %v815, %v813
        %v848 = vld [vmem:[%s355] sm:$0xff]
        %v849 = vld [vmem:[%s355 + $0x8] sm:$0xff]
        %v850 = vld [vmem:[%s355 + $0x10] sm:$0xff]
        %v851 = vld [vmem:[%s355 + $0x18] sm:$0xff]
        %v852 = vld [vmem:[%s355 + $0x20] sm:$0xff]
        %v853 = vld [vmem:[%s355 + $0x28] sm:$0xff]
        %v854 = vld [vmem:[%s355 + $0x30] sm:$0xff]
        %v855 = vld [vmem:[%s355 + $0x38] sm:$0xff]
        %v856 = vld [vmem:[%s355 + $0x40] sm:$0xff]
        %v857 = vld [vmem:[%s355 + $0x48] sm:$0xff]
        %v858 = vld [vmem:[%s355 + $0x50] sm:$0xff]
        %v859 = vld [vmem:[%s355 + $0x58] sm:$0xff]
        %v860 = vld [vmem:[%s355 + $0x60] sm:$0xff]
        %v861 = vld [vmem:[%s355 + $0x68] sm:$0xff]
        %v862 = vld [vmem:[%s355 + $0x70] sm:$0xff]
        %v863 = vld [vmem:[%s355 + $0x78] sm:$0xff]
        %v864 = vld [vmem:[%s355 + $0x80] sm:$0xff]
        %v865 = vld [vmem:[%s355 + $0x88] sm:$0xff]
        %v866 = vld [vmem:[%s355 + $0x90] sm:$0xff]
        %v867 = vld [vmem:[%s355 + $0x98] sm:$0xff]
        %v868 = vld [vmem:[%s355 + $0xa0] sm:$0xff]
        %v869 = vld [vmem:[%s355 + $0xa8] sm:$0xff]
        %v870 = vld [vmem:[%s355 + $0xb0] sm:$0xff]
        %v871 = vld [vmem:[%s355 + $0xb8] sm:$0xff]
        %v872 = vld [vmem:[%s355 + $0xc0] sm:$0xff]
        %v873 = vld [vmem:[%s355 + $0xc8] sm:$0xff]
        %v874 = vld [vmem:[%s355 + $0xd0] sm:$0xff]
        %v875 = vld [vmem:[%s355 + $0xd8] sm:$0xff]
        %v876 = vld [vmem:[%s355 + $0xe0] sm:$0xff]
        %v877 = vld [vmem:[%s355 + $0xe8] sm:$0xff]
        %v878 = vld [vmem:[%s355 + $0xf0] sm:$0xff]
        %v879 = vld [vmem:[%s355 + $0xf8] sm:$0xff]
        %v880 = vld [vmem:[%s355 + $0x100] sm:$0xff]
        %v881 = vld [vmem:[%s355 + $0x108] sm:$0xff]
        %v882 = vld [vmem:[%s355 + $0x110] sm:$0xff]
        %v883 = vld [vmem:[%s355 + $0x118] sm:$0xff]
        %v884 = vld [vmem:[%s355 + $0x120] sm:$0xff]
        %v885 = vld [vmem:[%s355 + $0x128] sm:$0xff]
        %v886 = vld [vmem:[%s355 + $0x130] sm:$0xff]
        %v887 = vld [vmem:[%s355 + $0x138] sm:$0xff]
        %v888 = vld [vmem:[%s355 + $0x140] sm:$0xff]
        %v889 = vld [vmem:[%s355 + $0x148] sm:$0xff]
        %v890 = vld [vmem:[%s355 + $0x150] sm:$0xff]
        %v891 = vld [vmem:[%s355 + $0x158] sm:$0xff]
        %v892 = vld [vmem:[%s355 + $0x160] sm:$0xff]
        %v893 = vld [vmem:[%s355 + $0x168] sm:$0xff]
        %v894 = vld [vmem:[%s355 + $0x170] sm:$0xff]
        %v895 = vld [vmem:[%s355 + $0x178] sm:$0xff]
        %v896 = vld [vmem:[%s355 + $0x180] sm:$0xff]
        %v897 = vld [vmem:[%s355 + $0x188] sm:$0xff]
        %v898 = vld [vmem:[%s355 + $0x190] sm:$0xff]
        %v899 = vld [vmem:[%s355 + $0x198] sm:$0xff]
        %v900 = vld [vmem:[%s355 + $0x1a0] sm:$0xff]
        %v901 = vld [vmem:[%s355 + $0x1a8] sm:$0xff]
        %v902 = vld [vmem:[%s355 + $0x1b0] sm:$0xff]
        %v903 = vld [vmem:[%s355 + $0x1b8] sm:$0xff]
        %v904 = vld [vmem:[%s355 + $0x1c0] sm:$0xff]
        %v905 = vld [vmem:[%s355 + $0x1c8] sm:$0xff]
        %v906 = vld [vmem:[%s355 + $0x1d0] sm:$0xff]
        %v907 = vld [vmem:[%s355 + $0x1d8] sm:$0xff]
        %v908 = vld [vmem:[%s355 + $0x1e0] sm:$0xff]
        %v909 = vld [vmem:[%s355 + $0x1e8] sm:$0xff]
        %v910 = vld [vmem:[%s355 + $0x1f0] sm:$0xff]
        %v911 = vld [vmem:[%s355 + $0x1f8] sm:$0xff]
        %v912 = vld [vmem:[%s441] sm:$0xf]
        %v914 = vperm.slane %v912, 0
        %v915 = vperm.slane %v912, 1
        %v916 = vperm.slane %v912, 2
        %v917 = vperm.slane %v912, 3
        %v986 = vunpack.c.l.b16 %v848
        %v987 = vunpack.c.h.b16 %v848
        %v988 = vunpack.c.l.b16 %v849
        %v989 = vunpack.c.h.b16 %v849
        %v990 = vunpack.c.l.b16 %v850
        %v991 = vunpack.c.h.b16 %v850
        %v992 = vunpack.c.l.b16 %v851
        %v993 = vunpack.c.h.b16 %v851
        %v994 = vunpack.c.l.b16 %v852
        %v995 = vunpack.c.h.b16 %v852
        %v996 = vunpack.c.l.b16 %v853
        %v997 = vunpack.c.h.b16 %v853
        %v998 = vunpack.c.l.b16 %v854
        %v999 = vunpack.c.h.b16 %v854
        %v1000 = vunpack.c.l.b16 %v855
        %v1001 = vunpack.c.h.b16 %v855
        %v1002 = vunpack.c.l.b16 %v856
        %v1003 = vunpack.c.h.b16 %v856
        %v1004 = vunpack.c.l.b16 %v857
        %v1005 = vunpack.c.h.b16 %v857
        %v1006 = vunpack.c.l.b16 %v858
        %v1007 = vunpack.c.h.b16 %v858
        %v1008 = vunpack.c.l.b16 %v859
        %v1009 = vunpack.c.h.b16 %v859
        %v1010 = vunpack.c.l.b16 %v860
        %v1011 = vunpack.c.h.b16 %v860
        %v1012 = vunpack.c.l.b16 %v861
        %v1013 = vunpack.c.h.b16 %v861
        %v1014 = vunpack.c.l.b16 %v862
        %v1015 = vunpack.c.h.b16 %v862
        %v1016 = vunpack.c.l.b16 %v863
        %v1017 = vunpack.c.h.b16 %v863
        %v1018 = vunpack.c.l.b16 %v864
        %v1019 = vunpack.c.h.b16 %v864
        %v1020 = vunpack.c.l.b16 %v865
        %v1021 = vunpack.c.h.b16 %v865
        %v1022 = vunpack.c.l.b16 %v866
        %v1023 = vunpack.c.h.b16 %v866
        %v1024 = vunpack.c.l.b16 %v867
        %v1025 = vunpack.c.h.b16 %v867
        %v1026 = vunpack.c.l.b16 %v868
        %v1027 = vunpack.c.h.b16 %v868
        %v1028 = vunpack.c.l.b16 %v869
        %v1029 = vunpack.c.h.b16 %v869
        %v1030 = vunpack.c.l.b16 %v870
        %v1031 = vunpack.c.h.b16 %v870
        %v1032 = vunpack.c.l.b16 %v871
        %v1033 = vunpack.c.h.b16 %v871
        %v1034 = vunpack.c.l.b16 %v872
        %v1035 = vunpack.c.h.b16 %v872
        %v1036 = vunpack.c.l.b16 %v873
        %v1037 = vunpack.c.h.b16 %v873
        %v1038 = vunpack.c.l.b16 %v874
        %v1039 = vunpack.c.h.b16 %v874
        %v1040 = vunpack.c.l.b16 %v875
        %v1041 = vunpack.c.h.b16 %v875
        %v1042 = vunpack.c.l.b16 %v876
        %v1043 = vunpack.c.h.b16 %v876
        %v1044 = vunpack.c.l.b16 %v877
        %v1045 = vunpack.c.h.b16 %v877
        %v1046 = vunpack.c.l.b16 %v878
        %v1047 = vunpack.c.h.b16 %v878
        %v1048 = vunpack.c.l.b16 %v879
        %v1049 = vunpack.c.h.b16 %v879
        %v1050 = vunpack.c.l.b16 %v880
        %v1051 = vunpack.c.h.b16 %v880
        %v1052 = vunpack.c.l.b16 %v881
        %v1053 = vunpack.c.h.b16 %v881
        %v1054 = vunpack.c.l.b16 %v882
        %v1055 = vunpack.c.h.b16 %v882
        %v1056 = vunpack.c.l.b16 %v883
        %v1057 = vunpack.c.h.b16 %v883
        %v1058 = vunpack.c.l.b16 %v884
        %v1059 = vunpack.c.h.b16 %v884
        %v1060 = vunpack.c.l.b16 %v885
        %v1061 = vunpack.c.h.b16 %v885
        %v1062 = vunpack.c.l.b16 %v886
        %v1063 = vunpack.c.h.b16 %v886
        %v1064 = vunpack.c.l.b16 %v887
        %v1065 = vunpack.c.h.b16 %v887
        %v1066 = vunpack.c.l.b16 %v888
        %v1067 = vunpack.c.h.b16 %v888
        %v1068 = vunpack.c.l.b16 %v889
        %v1069 = vunpack.c.h.b16 %v889
        %v1070 = vunpack.c.l.b16 %v890
        %v1071 = vunpack.c.h.b16 %v890
        %v1072 = vunpack.c.l.b16 %v891
        %v1073 = vunpack.c.h.b16 %v891
        %v1074 = vunpack.c.l.b16 %v892
        %v1075 = vunpack.c.h.b16 %v892
        %v1076 = vunpack.c.l.b16 %v893
        %v1077 = vunpack.c.h.b16 %v893
        %v1078 = vunpack.c.l.b16 %v894
        %v1079 = vunpack.c.h.b16 %v894
        %v1080 = vunpack.c.l.b16 %v895
        %v1081 = vunpack.c.h.b16 %v895
        %v1082 = vunpack.c.l.b16 %v896
        %v1083 = vunpack.c.h.b16 %v896
        %v1084 = vunpack.c.l.b16 %v897
        %v1085 = vunpack.c.h.b16 %v897
        %v1086 = vunpack.c.l.b16 %v898
        %v1087 = vunpack.c.h.b16 %v898
        %v1088 = vunpack.c.l.b16 %v899
        %v1089 = vunpack.c.h.b16 %v899
        %v1090 = vunpack.c.l.b16 %v900
        %v1091 = vunpack.c.h.b16 %v900
        %v1092 = vunpack.c.l.b16 %v901
        %v1093 = vunpack.c.h.b16 %v901
        %v1094 = vunpack.c.l.b16 %v902
        %v1095 = vunpack.c.h.b16 %v902
        %v1096 = vunpack.c.l.b16 %v903
        %v1097 = vunpack.c.h.b16 %v903
        %v1098 = vunpack.c.l.b16 %v904
        %v1099 = vunpack.c.h.b16 %v904
        %v1100 = vunpack.c.l.b16 %v905
        %v1101 = vunpack.c.h.b16 %v905
        %v1102 = vunpack.c.l.b16 %v906
        %v1103 = vunpack.c.h.b16 %v906
        %v1104 = vunpack.c.l.b16 %v907
        %v1105 = vunpack.c.h.b16 %v907
        %v1106 = vunpack.c.l.b16 %v908
        %v1107 = vunpack.c.h.b16 %v908
        %v1108 = vunpack.c.l.b16 %v909
        %v1109 = vunpack.c.h.b16 %v909
        %v1110 = vunpack.c.l.b16 %v910
        %v1111 = vunpack.c.h.b16 %v910
        %v1112 = vunpack.c.l.b16 %v911
        %v1113 = vunpack.c.h.b16 %v911
        %v1114 = vpack.c.b16 %v990, %v986
        %v1115 = vpack.c.b16 %v991, %v987
        %v1116 = vpack.c.b16 %v992, %v988
        %v1117 = vpack.c.b16 %v993, %v989
        %v1118 = vpack.c.b16 %v998, %v994
        %v1119 = vpack.c.b16 %v999, %v995
        %v1120 = vpack.c.b16 %v1000, %v996
        %v1121 = vpack.c.b16 %v1001, %v997
        %v1122 = vpack.c.b16 %v1006, %v1002
        %v1123 = vpack.c.b16 %v1007, %v1003
        %v1124 = vpack.c.b16 %v1008, %v1004
        %v1125 = vpack.c.b16 %v1009, %v1005
        %v1126 = vpack.c.b16 %v1014, %v1010
        %v1127 = vpack.c.b16 %v1015, %v1011
        %v1128 = vpack.c.b16 %v1016, %v1012
        %v1129 = vpack.c.b16 %v1017, %v1013
        %v1130 = vpack.c.b16 %v1022, %v1018
        %v1131 = vpack.c.b16 %v1023, %v1019
        %v1132 = vpack.c.b16 %v1024, %v1020
        %v1133 = vpack.c.b16 %v1025, %v1021
        %v1134 = vpack.c.b16 %v1030, %v1026
        %v1135 = vpack.c.b16 %v1031, %v1027
        %v1136 = vpack.c.b16 %v1032, %v1028
        %v1137 = vpack.c.b16 %v1033, %v1029
        %v1138 = vpack.c.b16 %v1038, %v1034
        %v1139 = vpack.c.b16 %v1039, %v1035
        %v1140 = vpack.c.b16 %v1040, %v1036
        %v1141 = vpack.c.b16 %v1041, %v1037
        %v1142 = vpack.c.b16 %v1046, %v1042
        %v1143 = vpack.c.b16 %v1047, %v1043
        %v1144 = vpack.c.b16 %v1048, %v1044
        %v1145 = vpack.c.b16 %v1049, %v1045
        %v1146 = vpack.c.b16 %v1054, %v1050
        %v1147 = vpack.c.b16 %v1055, %v1051
        %v1148 = vpack.c.b16 %v1056, %v1052
        %v1149 = vpack.c.b16 %v1057, %v1053
        %v1150 = vpack.c.b16 %v1062, %v1058
        %v1151 = vpack.c.b16 %v1063, %v1059
        %v1152 = vpack.c.b16 %v1064, %v1060
        %v1153 = vpack.c.b16 %v1065, %v1061
        %v1154 = vpack.c.b16 %v1070, %v1066
        %v1155 = vpack.c.b16 %v1071, %v1067
        %v1156 = vpack.c.b16 %v1072, %v1068
        %v1157 = vpack.c.b16 %v1073, %v1069
        %v1158 = vpack.c.b16 %v1078, %v1074
        %v1159 = vpack.c.b16 %v1079, %v1075
        %v1160 = vpack.c.b16 %v1080, %v1076
        %v1161 = vpack.c.b16 %v1081, %v1077
        %v1162 = vpack.c.b16 %v1086, %v1082
        %v1163 = vpack.c.b16 %v1087, %v1083
        %v1164 = vpack.c.b16 %v1088, %v1084
        %v1165 = vpack.c.b16 %v1089, %v1085
        %v1166 = vpack.c.b16 %v1094, %v1090
        %v1167 = vpack.c.b16 %v1095, %v1091
        %v1168 = vpack.c.b16 %v1096, %v1092
        %v1169 = vpack.c.b16 %v1097, %v1093
        %v1170 = vpack.c.b16 %v1102, %v1098
        %v1171 = vpack.c.b16 %v1103, %v1099
        %v1172 = vpack.c.b16 %v1104, %v1100
        %v1173 = vpack.c.b16 %v1105, %v1101
        %v1174 = vpack.c.b16 %v1110, %v1106
        %v1175 = vpack.c.b16 %v1111, %v1107
        %v1176 = vpack.c.b16 %v1112, %v1108
        %v1177 = vpack.c.b16 %v1113, %v1109
        %1242 = vmatpush.bf16.msra.mxu0 %v1142
        %1243 = vmatpush.bf16.msra.mxu0 %v1138
        %1244 = vmatpush.bf16.msra.mxu0 %v1134
        %1245 = vmatpush.bf16.msra.mxu0 %v1130
        %1246 = vmatpush.bf16.msra.mxu0 %v1126
        %1247 = vmatpush.bf16.msra.mxu0 %v1122
        %1248 = vmatpush.bf16.msra.mxu0 %v1118
        %1249 = vmatpush.bf16.msra.mxu0 %v1114
        %1250 = vmatmul.bf16.gmra.mxu0 %v816
        %v1251 = vpop.f32.mrf.mxu0
        %v1252 = vadd.f32 %v914, %v1251
        %v1253 = vpop.f32.mrf.mxu0
        %v1254 = vadd.f32 %v914, %v1253
        %1255 = vmatmul.bf16.gmra.mxu0 %v818
        %v1256 = vpop.f32.mrf.mxu0
        %v1257 = vadd.f32 %v914, %v1256
        %v1258 = vpop.f32.mrf.mxu0
        %v1259 = vadd.f32 %v914, %v1258
        %1260 = vmatmul.bf16.gmra.mxu0 %v820
        %v1261 = vpop.f32.mrf.mxu0
        %v1262 = vadd.f32 %v914, %v1261
        %v1263 = vpop.f32.mrf.mxu0
        %v1264 = vadd.f32 %v914, %v1263
        %1265 = vmatmul.bf16.gmra.mxu0 %v822
        %v1266 = vpop.f32.mrf.mxu0
        %v1267 = vadd.f32 %v914, %v1266
        %v1268 = vpop.f32.mrf.mxu0
        %v1269 = vadd.f32 %v914, %v1268
        %1270 = vmatmul.bf16.gmra.mxu0 %v824
        %v1271 = vpop.f32.mrf.mxu0
        %v1272 = vadd.f32 %v914, %v1271
        %v1273 = vpop.f32.mrf.mxu0
        %v1274 = vadd.f32 %v914, %v1273
        %1275 = vmatmul.bf16.gmra.mxu0 %v826
        %v1276 = vpop.f32.mrf.mxu0
        %v1277 = vadd.f32 %v914, %v1276
        %v1278 = vpop.f32.mrf.mxu0
        %v1279 = vadd.f32 %v914, %v1278
        %1280 = vmatmul.bf16.gmra.mxu0 %v828
        %v1281 = vpop.f32.mrf.mxu0
        %v1282 = vadd.f32 %v914, %v1281
        %v1283 = vpop.f32.mrf.mxu0
        %v1284 = vadd.f32 %v914, %v1283
        %1285 = vmatmul.bf16.gmra.mxu0 %v830
        %v1286 = vpop.f32.mrf.mxu0
        %v1287 = vadd.f32 %v914, %v1286
        %v1288 = vpop.f32.mrf.mxu0
        %v1289 = vadd.f32 %v914, %v1288
        %1290 = vmatmul.bf16.gmra.mxu0 %v832
        %v1291 = vpop.f32.mrf.mxu0
        %v1292 = vadd.f32 %v914, %v1291
        %v1293 = vpop.f32.mrf.mxu0
        %v1294 = vadd.f32 %v914, %v1293
        %1295 = vmatmul.bf16.gmra.mxu0 %v834
        %v1296 = vpop.f32.mrf.mxu0
        %v1297 = vadd.f32 %v914, %v1296
        %v1298 = vpop.f32.mrf.mxu0
        %v1299 = vadd.f32 %v914, %v1298
        %1300 = vmatmul.bf16.gmra.mxu0 %v836
        %v1301 = vpop.f32.mrf.mxu0
        %v1302 = vadd.f32 %v914, %v1301
        %v1303 = vpop.f32.mrf.mxu0
        %v1304 = vadd.f32 %v914, %v1303
        %1305 = vmatmul.bf16.gmra.mxu0 %v838
        %v1306 = vpop.f32.mrf.mxu0
        %v1307 = vadd.f32 %v914, %v1306
        %v1308 = vpop.f32.mrf.mxu0
        %v1309 = vadd.f32 %v914, %v1308
        %1310 = vmatmul.bf16.gmra.mxu0 %v840
        %v1311 = vpop.f32.mrf.mxu0
        %v1312 = vadd.f32 %v914, %v1311
        %v1313 = vpop.f32.mrf.mxu0
        %v1314 = vadd.f32 %v914, %v1313
        %1315 = vmatmul.bf16.gmra.mxu0 %v842
        %v1316 = vpop.f32.mrf.mxu0
        %v1317 = vadd.f32 %v914, %v1316
        %v1318 = vpop.f32.mrf.mxu0
        %v1319 = vadd.f32 %v914, %v1318
        %1320 = vmatmul.bf16.gmra.mxu0 %v844
        %v1321 = vpop.f32.mrf.mxu0
        %v1322 = vadd.f32 %v914, %v1321
        %v1323 = vpop.f32.mrf.mxu0
        %v1324 = vadd.f32 %v914, %v1323
        %1325 = vmatmul.bf16.gmra.mxu0 %v846
        %v1326 = vpop.f32.mrf.mxu0
        %v1327 = vadd.f32 %v914, %v1326
        %v1328 = vpop.f32.mrf.mxu0
        %v1329 = vadd.f32 %v914, %v1328
        %1330 = vdwg.mxu0
        %1331 = vmatpush.bf16.msra.mxu0 %v1174
        %1332 = vmatpush.bf16.msra.mxu0 %v1170
        %1333 = vmatpush.bf16.msra.mxu0 %v1166
        %1334 = vmatpush.bf16.msra.mxu0 %v1162
        %1335 = vmatpush.bf16.msra.mxu0 %v1158
        %1336 = vmatpush.bf16.msra.mxu0 %v1154
        %1337 = vmatpush.bf16.msra.mxu0 %v1150
        %1338 = vmatpush.bf16.msra.mxu0 %v1146
        %1339 = vmatmul.bf16.gmra.mxu0 %v817
        %v1340 = vpop.f32.mrf.mxu0
        %v1341 = vadd.f32 %v1252, %v1340
        %v1342 = vpop.f32.mrf.mxu0
        %v1343 = vadd.f32 %v1254, %v1342
        %1344 = vmatmul.bf16.gmra.mxu0 %v819
        %v1345 = vpop.f32.mrf.mxu0
        %v1346 = vadd.f32 %v1257, %v1345
        %v1347 = vpop.f32.mrf.mxu0
        %v1348 = vadd.f32 %v1259, %v1347
        %1349 = vmatmul.bf16.gmra.mxu0 %v821
        %v1350 = vpop.f32.mrf.mxu0
        %v1351 = vadd.f32 %v1262, %v1350
        %v1352 = vpop.f32.mrf.mxu0
        %v1353 = vadd.f32 %v1264, %v1352
        %1354 = vmatmul.bf16.gmra.mxu0 %v823
        %v1355 = vpop.f32.mrf.mxu0
        %v1356 = vadd.f32 %v1267, %v1355
        %v1357 = vpop.f32.mrf.mxu0
        %v1358 = vadd.f32 %v1269, %v1357
        %1359 = vmatmul.bf16.gmra.mxu0 %v825
        %v1360 = vpop.f32.mrf.mxu0
        %v1361 = vadd.f32 %v1272, %v1360
        %v1362 = vpop.f32.mrf.mxu0
        %v1363 = vadd.f32 %v1274, %v1362
        %1364 = vmatmul.bf16.gmra.mxu0 %v827
        %v1365 = vpop.f32.mrf.mxu0
        %v1366 = vadd.f32 %v1277, %v1365
        %v1367 = vpop.f32.mrf.mxu0
        %v1368 = vadd.f32 %v1279, %v1367
        %1369 = vmatmul.bf16.gmra.mxu0 %v829
        %v1370 = vpop.f32.mrf.mxu0
        %v1371 = vadd.f32 %v1282, %v1370
        %v1372 = vpop.f32.mrf.mxu0
        %v1373 = vadd.f32 %v1284, %v1372
        %1374 = vmatmul.bf16.gmra.mxu0 %v831
        %v1375 = vpop.f32.mrf.mxu0
        %v1376 = vadd.f32 %v1287, %v1375
        %v1377 = vpop.f32.mrf.mxu0
        %v1378 = vadd.f32 %v1289, %v1377
        %1379 = vmatmul.bf16.gmra.mxu0 %v833
        %v1380 = vpop.f32.mrf.mxu0
        %v1381 = vadd.f32 %v1292, %v1380
        %v1382 = vpop.f32.mrf.mxu0
        %v1383 = vadd.f32 %v1294, %v1382
        %1384 = vmatmul.bf16.gmra.mxu0 %v835
        %v1385 = vpop.f32.mrf.mxu0
        %v1386 = vadd.f32 %v1297, %v1385
        %v1387 = vpop.f32.mrf.mxu0
        %v1388 = vadd.f32 %v1299, %v1387
        %1389 = vmatmul.bf16.gmra.mxu0 %v837
        %v1390 = vpop.f32.mrf.mxu0
        %v1391 = vadd.f32 %v1302, %v1390
        %v1392 = vpop.f32.mrf.mxu0
        %v1393 = vadd.f32 %v1304, %v1392
        %1394 = vmatmul.bf16.gmra.mxu0 %v839
        %v1395 = vpop.f32.mrf.mxu0
        %v1396 = vadd.f32 %v1307, %v1395
        %v1397 = vpop.f32.mrf.mxu0
        %v1398 = vadd.f32 %v1309, %v1397
        %1399 = vmatmul.bf16.gmra.mxu0 %v841
        %v1400 = vpop.f32.mrf.mxu0
        %v1401 = vadd.f32 %v1312, %v1400
        %v1402 = vpop.f32.mrf.mxu0
        %v1403 = vadd.f32 %v1314, %v1402
        %1404 = vmatmul.bf16.gmra.mxu0 %v843
        %v1405 = vpop.f32.mrf.mxu0
        %v1406 = vadd.f32 %v1317, %v1405
        %v1407 = vpop.f32.mrf.mxu0
        %v1408 = vadd.f32 %v1319, %v1407
        %1409 = vmatmul.bf16.gmra.mxu0 %v845
        %v1410 = vpop.f32.mrf.mxu0
        %v1411 = vadd.f32 %v1322, %v1410
        %v1412 = vpop.f32.mrf.mxu0
        %v1413 = vadd.f32 %v1324, %v1412
        %1414 = vmatmul.bf16.gmra.mxu0 %v847
        %v1415 = vpop.f32.mrf.mxu0
        %v1416 = vadd.f32 %v1327, %v1415
        %v1417 = vpop.f32.mrf.mxu0
        %v1418 = vadd.f32 %v1329, %v1417
        %1419 = vdwg.mxu0
        %1420 = vmatpush.bf16.msra.mxu0 %v1143
        %1421 = vmatpush.bf16.msra.mxu0 %v1139
        %1422 = vmatpush.bf16.msra.mxu0 %v1135
        %1423 = vmatpush.bf16.msra.mxu0 %v1131
        %1424 = vmatpush.bf16.msra.mxu0 %v1127
        %1425 = vmatpush.bf16.msra.mxu0 %v1123
        %1426 = vmatpush.bf16.msra.mxu0 %v1119
        %1427 = vmatpush.bf16.msra.mxu0 %v1115
        %1428 = vmatmul.bf16.gmra.mxu0 %v816
        %v1429 = vpop.f32.mrf.mxu0
        %v1430 = vadd.f32 %v915, %v1429
        %v1431 = vpop.f32.mrf.mxu0
        %v1432 = vadd.f32 %v915, %v1431
        %1433 = vmatmul.bf16.gmra.mxu0 %v818
        %v1434 = vpop.f32.mrf.mxu0
        %v1435 = vadd.f32 %v915, %v1434
        %v1436 = vpop.f32.mrf.mxu0
        %v1437 = vadd.f32 %v915, %v1436
        %1438 = vmatmul.bf16.gmra.mxu0 %v820
        %v1439 = vpop.f32.mrf.mxu0
        %v1440 = vadd.f32 %v915, %v1439
        %v1441 = vpop.f32.mrf.mxu0
        %v1442 = vadd.f32 %v915, %v1441
        %1443 = vmatmul.bf16.gmra.mxu0 %v822
        %v1444 = vpop.f32.mrf.mxu0
        %v1445 = vadd.f32 %v915, %v1444
        %v1446 = vpop.f32.mrf.mxu0
        %v1447 = vadd.f32 %v915, %v1446
        %1448 = vmatmul.bf16.gmra.mxu0 %v824
        %v1449 = vpop.f32.mrf.mxu0
        %v1450 = vadd.f32 %v915, %v1449
        %v1451 = vpop.f32.mrf.mxu0
        %v1452 = vadd.f32 %v915, %v1451
        %1453 = vmatmul.bf16.gmra.mxu0 %v826
        %v1454 = vpop.f32.mrf.mxu0
        %v1455 = vadd.f32 %v915, %v1454
        %v1456 = vpop.f32.mrf.mxu0
        %v1457 = vadd.f32 %v915, %v1456
        %1458 = vmatmul.bf16.gmra.mxu0 %v828
        %v1459 = vpop.f32.mrf.mxu0
        %v1460 = vadd.f32 %v915, %v1459
        %v1461 = vpop.f32.mrf.mxu0
        %v1462 = vadd.f32 %v915, %v1461
        %1463 = vmatmul.bf16.gmra.mxu0 %v830
        %v1464 = vpop.f32.mrf.mxu0
        %v1465 = vadd.f32 %v915, %v1464
        %v1466 = vpop.f32.mrf.mxu0
        %v1467 = vadd.f32 %v915, %v1466
        %1468 = vmatmul.bf16.gmra.mxu0 %v832
        %v1469 = vpop.f32.mrf.mxu0
        %v1470 = vadd.f32 %v915, %v1469
        %v1471 = vpop.f32.mrf.mxu0
        %v1472 = vadd.f32 %v915, %v1471
        %1473 = vmatmul.bf16.gmra.mxu0 %v834
        %v1474 = vpop.f32.mrf.mxu0
        %v1475 = vadd.f32 %v915, %v1474
        %v1476 = vpop.f32.mrf.mxu0
        %v1477 = vadd.f32 %v915, %v1476
        %1478 = vmatmul.bf16.gmra.mxu0 %v836
        %v1479 = vpop.f32.mrf.mxu0
        %v1480 = vadd.f32 %v915, %v1479
        %v1481 = vpop.f32.mrf.mxu0
        %v1482 = vadd.f32 %v915, %v1481
        %1483 = vmatmul.bf16.gmra.mxu0 %v838
        %v1484 = vpop.f32.mrf.mxu0
        %v1485 = vadd.f32 %v915, %v1484
        %v1486 = vpop.f32.mrf.mxu0
        %v1487 = vadd.f32 %v915, %v1486
        %1488 = vmatmul.bf16.gmra.mxu0 %v840
        %v1489 = vpop.f32.mrf.mxu0
        %v1490 = vadd.f32 %v915, %v1489
        %v1491 = vpop.f32.mrf.mxu0
        %v1492 = vadd.f32 %v915, %v1491
        %1493 = vmatmul.bf16.gmra.mxu0 %v842
        %v1494 = vpop.f32.mrf.mxu0
        %v1495 = vadd.f32 %v915, %v1494
        %v1496 = vpop.f32.mrf.mxu0
        %v1497 = vadd.f32 %v915, %v1496
        %1498 = vmatmul.bf16.gmra.mxu0 %v844
        %v1499 = vpop.f32.mrf.mxu0
        %v1500 = vadd.f32 %v915, %v1499
        %v1501 = vpop.f32.mrf.mxu0
        %v1502 = vadd.f32 %v915, %v1501
        %1503 = vmatmul.bf16.gmra.mxu0 %v846
        %v1504 = vpop.f32.mrf.mxu0
        %v1505 = vadd.f32 %v915, %v1504
        %v1506 = vpop.f32.mrf.mxu0
        %v1507 = vadd.f32 %v915, %v1506
        %1508 = vdwg.mxu0
        %1509 = vmatpush.bf16.msra.mxu0 %v1175
        %1510 = vmatpush.bf16.msra.mxu0 %v1171
        %1511 = vmatpush.bf16.msra.mxu0 %v1167
        %1512 = vmatpush.bf16.msra.mxu0 %v1163
        %1513 = vmatpush.bf16.msra.mxu0 %v1159
        %1514 = vmatpush.bf16.msra.mxu0 %v1155
        %1515 = vmatpush.bf16.msra.mxu0 %v1151
        %1516 = vmatpush.bf16.msra.mxu0 %v1147
        %1517 = vmatmul.bf16.gmra.mxu0 %v817
        %v1518 = vpop.f32.mrf.mxu0
        %v1519 = vadd.f32 %v1430, %v1518
        %v1520 = vpop.f32.mrf.mxu0
        %v1521 = vadd.f32 %v1432, %v1520
        %1522 = vmatmul.bf16.gmra.mxu0 %v819
        %v1523 = vpop.f32.mrf.mxu0
        %v1524 = vadd.f32 %v1435, %v1523
        %v1525 = vpop.f32.mrf.mxu0
        %v1526 = vadd.f32 %v1437, %v1525
        %1527 = vmatmul.bf16.gmra.mxu0 %v821
        %v1528 = vpop.f32.mrf.mxu0
        %v1529 = vadd.f32 %v1440, %v1528
        %v1530 = vpop.f32.mrf.mxu0
        %v1531 = vadd.f32 %v1442, %v1530
        %1532 = vmatmul.bf16.gmra.mxu0 %v823
        %v1533 = vpop.f32.mrf.mxu0
        %v1534 = vadd.f32 %v1445, %v1533
        %v1535 = vpop.f32.mrf.mxu0
        %v1536 = vadd.f32 %v1447, %v1535
        %1537 = vmatmul.bf16.gmra.mxu0 %v825
        %v1538 = vpop.f32.mrf.mxu0
        %v1539 = vadd.f32 %v1450, %v1538
        %v1540 = vpop.f32.mrf.mxu0
        %v1541 = vadd.f32 %v1452, %v1540
        %1542 = vmatmul.bf16.gmra.mxu0 %v827
        %v1543 = vpop.f32.mrf.mxu0
        %v1544 = vadd.f32 %v1455, %v1543
        %v1545 = vpop.f32.mrf.mxu0
        %v1546 = vadd.f32 %v1457, %v1545
        %1547 = vmatmul.bf16.gmra.mxu0 %v829
        %v1548 = vpop.f32.mrf.mxu0
        %v1549 = vadd.f32 %v1460, %v1548
        %v1550 = vpop.f32.mrf.mxu0
        %v1551 = vadd.f32 %v1462, %v1550
        %1552 = vmatmul.bf16.gmra.mxu0 %v831
        %v1553 = vpop.f32.mrf.mxu0
        %v1554 = vadd.f32 %v1465, %v1553
        %v1555 = vpop.f32.mrf.mxu0
        %v1556 = vadd.f32 %v1467, %v1555
        %1557 = vmatmul.bf16.gmra.mxu0 %v833
        %v1558 = vpop.f32.mrf.mxu0
        %v1559 = vadd.f32 %v1470, %v1558
        %v1560 = vpop.f32.mrf.mxu0
        %v1561 = vadd.f32 %v1472, %v1560
        %1562 = vmatmul.bf16.gmra.mxu0 %v835
        %v1563 = vpop.f32.mrf.mxu0
        %v1564 = vadd.f32 %v1475, %v1563
        %v1565 = vpop.f32.mrf.mxu0
        %v1566 = vadd.f32 %v1477, %v1565
        %1567 = vmatmul.bf16.gmra.mxu0 %v837
        %v1568 = vpop.f32.mrf.mxu0
        %v1569 = vadd.f32 %v1480, %v1568
        %v1570 = vpop.f32.mrf.mxu0
        %v1571 = vadd.f32 %v1482, %v1570
        %1572 = vmatmul.bf16.gmra.mxu0 %v839
        %v1573 = vpop.f32.mrf.mxu0
        %v1574 = vadd.f32 %v1485, %v1573
        %v1575 = vpop.f32.mrf.mxu0
        %v1576 = vadd.f32 %v1487, %v1575
        %1577 = vmatmul.bf16.gmra.mxu0 %v841
        %v1578 = vpop.f32.mrf.mxu0
        %v1579 = vadd.f32 %v1490, %v1578
        %v1580 = vpop.f32.mrf.mxu0
        %v1581 = vadd.f32 %v1492, %v1580
        %1582 = vmatmul.bf16.gmra.mxu0 %v843
        %v1583 = vpop.f32.mrf.mxu0
        %v1584 = vadd.f32 %v1495, %v1583
        %v1585 = vpop.f32.mrf.mxu0
        %v1586 = vadd.f32 %v1497, %v1585
        %1587 = vmatmul.bf16.gmra.mxu0 %v845
        %v1588 = vpop.f32.mrf.mxu0
        %v1589 = vadd.f32 %v1500, %v1588
        %v1590 = vpop.f32.mrf.mxu0
        %v1591 = vadd.f32 %v1502, %v1590
        %1592 = vmatmul.bf16.gmra.mxu0 %v847
        %v1593 = vpop.f32.mrf.mxu0
        %v1594 = vadd.f32 %v1505, %v1593
        %v1595 = vpop.f32.mrf.mxu0
        %v1596 = vadd.f32 %v1507, %v1595
        %1597 = vdwg.mxu0
        %1598 = vmatpush.bf16.msra.mxu0 %v1144
        %1599 = vmatpush.bf16.msra.mxu0 %v1140
        %1600 = vmatpush.bf16.msra.mxu0 %v1136
        %1601 = vmatpush.bf16.msra.mxu0 %v1132
        %1602 = vmatpush.bf16.msra.mxu0 %v1128
        %1603 = vmatpush.bf16.msra.mxu0 %v1124
        %1604 = vmatpush.bf16.msra.mxu0 %v1120
        %1605 = vmatpush.bf16.msra.mxu0 %v1116
        %1606 = vmatmul.bf16.gmra.mxu0 %v816
        %v1607 = vpop.f32.mrf.mxu0
        %v1608 = vadd.f32 %v916, %v1607
        %v1609 = vpop.f32.mrf.mxu0
        %v1610 = vadd.f32 %v916, %v1609
        %1611 = vmatmul.bf16.gmra.mxu0 %v818
        %v1612 = vpop.f32.mrf.mxu0
        %v1613 = vadd.f32 %v916, %v1612
        %v1614 = vpop.f32.mrf.mxu0
        %v1615 = vadd.f32 %v916, %v1614
        %1616 = vmatmul.bf16.gmra.mxu0 %v820
        %v1617 = vpop.f32.mrf.mxu0
        %v1618 = vadd.f32 %v916, %v1617
        %v1619 = vpop.f32.mrf.mxu0
        %v1620 = vadd.f32 %v916, %v1619
        %1621 = vmatmul.bf16.gmra.mxu0 %v822
        %v1622 = vpop.f32.mrf.mxu0
        %v1623 = vadd.f32 %v916, %v1622
        %v1624 = vpop.f32.mrf.mxu0
        %v1625 = vadd.f32 %v916, %v1624
        %1626 = vmatmul.bf16.gmra.mxu0 %v824
        %v1627 = vpop.f32.mrf.mxu0
        %v1628 = vadd.f32 %v916, %v1627
        %v1629 = vpop.f32.mrf.mxu0
        %v1630 = vadd.f32 %v916, %v1629
        %1631 = vmatmul.bf16.gmra.mxu0 %v826
        %v1632 = vpop.f32.mrf.mxu0
        %v1633 = vadd.f32 %v916, %v1632
        %v1634 = vpop.f32.mrf.mxu0
        %v1635 = vadd.f32 %v916, %v1634
        %1636 = vmatmul.bf16.gmra.mxu0 %v828
        %v1637 = vpop.f32.mrf.mxu0
        %v1638 = vadd.f32 %v916, %v1637
        %v1639 = vpop.f32.mrf.mxu0
        %v1640 = vadd.f32 %v916, %v1639
        %1641 = vmatmul.bf16.gmra.mxu0 %v830
        %v1642 = vpop.f32.mrf.mxu0
        %v1643 = vadd.f32 %v916, %v1642
        %v1644 = vpop.f32.mrf.mxu0
        %v1645 = vadd.f32 %v916, %v1644
        %1646 = vmatmul.bf16.gmra.mxu0 %v832
        %v1647 = vpop.f32.mrf.mxu0
        %v1648 = vadd.f32 %v916, %v1647
        %v1649 = vpop.f32.mrf.mxu0
        %v1650 = vadd.f32 %v916, %v1649
        %1651 = vmatmul.bf16.gmra.mxu0 %v834
        %v1652 = vpop.f32.mrf.mxu0
        %v1653 = vadd.f32 %v916, %v1652
        %v1654 = vpop.f32.mrf.mxu0
        %v1655 = vadd.f32 %v916, %v1654
        %1656 = vmatmul.bf16.gmra.mxu0 %v836
        %v1657 = vpop.f32.mrf.mxu0
        %v1658 = vadd.f32 %v916, %v1657
        %v1659 = vpop.f32.mrf.mxu0
        %v1660 = vadd.f32 %v916, %v1659
        %1661 = vmatmul.bf16.gmra.mxu0 %v838
        %v1662 = vpop.f32.mrf.mxu0
        %v1663 = vadd.f32 %v916, %v1662
        %v1664 = vpop.f32.mrf.mxu0
        %v1665 = vadd.f32 %v916, %v1664
        %1666 = vmatmul.bf16.gmra.mxu0 %v840
        %v1667 = vpop.f32.mrf.mxu0
        %v1668 = vadd.f32 %v916, %v1667
        %v1669 = vpop.f32.mrf.mxu0
        %v1670 = vadd.f32 %v916, %v1669
        %1671 = vmatmul.bf16.gmra.mxu0 %v842
        %v1672 = vpop.f32.mrf.mxu0
        %v1673 = vadd.f32 %v916, %v1672
        %v1674 = vpop.f32.mrf.mxu0
        %v1675 = vadd.f32 %v916, %v1674
        %1676 = vmatmul.bf16.gmra.mxu0 %v844
        %v1677 = vpop.f32.mrf.mxu0
        %v1678 = vadd.f32 %v916, %v1677
        %v1679 = vpop.f32.mrf.mxu0
        %v1680 = vadd.f32 %v916, %v1679
        %1681 = vmatmul.bf16.gmra.mxu0 %v846
        %v1682 = vpop.f32.mrf.mxu0
        %v1683 = vadd.f32 %v916, %v1682
        %v1684 = vpop.f32.mrf.mxu0
        %v1685 = vadd.f32 %v916, %v1684
        %1686 = vdwg.mxu0
        %1687 = vmatpush.bf16.msra.mxu0 %v1176
        %1688 = vmatpush.bf16.msra.mxu0 %v1172
        %1689 = vmatpush.bf16.msra.mxu0 %v1168
        %1690 = vmatpush.bf16.msra.mxu0 %v1164
        %1691 = vmatpush.bf16.msra.mxu0 %v1160
        %1692 = vmatpush.bf16.msra.mxu0 %v1156
        %1693 = vmatpush.bf16.msra.mxu0 %v1152
        %1694 = vmatpush.bf16.msra.mxu0 %v1148
        %1695 = vmatmul.bf16.gmra.mxu0 %v817
        %v1696 = vpop.f32.mrf.mxu0
        %v1697 = vadd.f32 %v1608, %v1696
        %v1698 = vpop.f32.mrf.mxu0
        %v1699 = vadd.f32 %v1610, %v1698
        %1700 = vmatmul.bf16.gmra.mxu0 %v819
        %v1701 = vpop.f32.mrf.mxu0
        %v1702 = vadd.f32 %v1613, %v1701
        %v1703 = vpop.f32.mrf.mxu0
        %v1704 = vadd.f32 %v1615, %v1703
        %1705 = vmatmul.bf16.gmra.mxu0 %v821
        %v1706 = vpop.f32.mrf.mxu0
        %v1707 = vadd.f32 %v1618, %v1706
        %v1708 = vpop.f32.mrf.mxu0
        %v1709 = vadd.f32 %v1620, %v1708
        %1710 = vmatmul.bf16.gmra.mxu0 %v823
        %v1711 = vpop.f32.mrf.mxu0
        %v1712 = vadd.f32 %v1623, %v1711
        %v1713 = vpop.f32.mrf.mxu0
        %v1714 = vadd.f32 %v1625, %v1713
        %1715 = vmatmul.bf16.gmra.mxu0 %v825
        %v1716 = vpop.f32.mrf.mxu0
        %v1717 = vadd.f32 %v1628, %v1716
        %v1718 = vpop.f32.mrf.mxu0
        %v1719 = vadd.f32 %v1630, %v1718
        %1720 = vmatmul.bf16.gmra.mxu0 %v827
        %v1721 = vpop.f32.mrf.mxu0
        %v1722 = vadd.f32 %v1633, %v1721
        %v1723 = vpop.f32.mrf.mxu0
        %v1724 = vadd.f32 %v1635, %v1723
        %1725 = vmatmul.bf16.gmra.mxu0 %v829
        %v1726 = vpop.f32.mrf.mxu0
        %v1727 = vadd.f32 %v1638, %v1726
        %v1728 = vpop.f32.mrf.mxu0
        %v1729 = vadd.f32 %v1640, %v1728
        %1730 = vmatmul.bf16.gmra.mxu0 %v831
        %v1731 = vpop.f32.mrf.mxu0
        %v1732 = vadd.f32 %v1643, %v1731
        %v1733 = vpop.f32.mrf.mxu0
        %v1734 = vadd.f32 %v1645, %v1733
        %1735 = vmatmul.bf16.gmra.mxu0 %v833
        %v1736 = vpop.f32.mrf.mxu0
        %v1737 = vadd.f32 %v1648, %v1736
        %v1738 = vpop.f32.mrf.mxu0
        %v1739 = vadd.f32 %v1650, %v1738
        %1740 = vmatmul.bf16.gmra.mxu0 %v835
        %v1741 = vpop.f32.mrf.mxu0
        %v1742 = vadd.f32 %v1653, %v1741
        %v1743 = vpop.f32.mrf.mxu0
        %v1744 = vadd.f32 %v1655, %v1743
        %1745 = vmatmul.bf16.gmra.mxu0 %v837
        %v1746 = vpop.f32.mrf.mxu0
        %v1747 = vadd.f32 %v1658, %v1746
        %v1748 = vpop.f32.mrf.mxu0
        %v1749 = vadd.f32 %v1660, %v1748
        %1750 = vmatmul.bf16.gmra.mxu0 %v839
        %v1751 = vpop.f32.mrf.mxu0
        %v1752 = vadd.f32 %v1663, %v1751
        %v1753 = vpop.f32.mrf.mxu0
        %v1754 = vadd.f32 %v1665, %v1753
        %1755 = vmatmul.bf16.gmra.mxu0 %v841
        %v1756 = vpop.f32.mrf.mxu0
        %v1757 = vadd.f32 %v1668, %v1756
        %v1758 = vpop.f32.mrf.mxu0
        %v1759 = vadd.f32 %v1670, %v1758
        %1760 = vmatmul.bf16.gmra.mxu0 %v843
        %v1761 = vpop.f32.mrf.mxu0
        %v1762 = vadd.f32 %v1673, %v1761
        %v1763 = vpop.f32.mrf.mxu0
        %v1764 = vadd.f32 %v1675, %v1763
        %1765 = vmatmul.bf16.gmra.mxu0 %v845
        %v1766 = vpop.f32.mrf.mxu0
        %v1767 = vadd.f32 %v1678, %v1766
        %v1768 = vpop.f32.mrf.mxu0
        %v1769 = vadd.f32 %v1680, %v1768
        %1770 = vmatmul.bf16.gmra.mxu0 %v847
        %v1771 = vpop.f32.mrf.mxu0
        %v1772 = vadd.f32 %v1683, %v1771
        %v1773 = vpop.f32.mrf.mxu0
        %v1774 = vadd.f32 %v1685, %v1773
        %1775 = vdwg.mxu0
        %1776 = vmatpush.bf16.msra.mxu0 %v1145
        %1777 = vmatpush.bf16.msra.mxu0 %v1141
        %1778 = vmatpush.bf16.msra.mxu0 %v1137
        %1779 = vmatpush.bf16.msra.mxu0 %v1133
        %1780 = vmatpush.bf16.msra.mxu0 %v1129
        %1781 = vmatpush.bf16.msra.mxu0 %v1125
        %1782 = vmatpush.bf16.msra.mxu0 %v1121
        %1783 = vmatpush.bf16.msra.mxu0 %v1117
        %1784 = vmatmul.bf16.gmra.mxu0 %v816
        %v1785 = vpop.f32.mrf.mxu0
        %v1786 = vadd.f32 %v917, %v1785
        %v1787 = vpop.f32.mrf.mxu0
        %v1788 = vadd.f32 %v917, %v1787
        %1789 = vmatmul.bf16.gmra.mxu0 %v818
        %v1790 = vpop.f32.mrf.mxu0
        %v1791 = vadd.f32 %v917, %v1790
        %v1792 = vpop.f32.mrf.mxu0
        %v1793 = vadd.f32 %v917, %v1792
        %1794 = vmatmul.bf16.gmra.mxu0 %v820
        %v1795 = vpop.f32.mrf.mxu0
        %v1796 = vadd.f32 %v917, %v1795
        %v1797 = vpop.f32.mrf.mxu0
        %v1798 = vadd.f32 %v917, %v1797
        %1799 = vmatmul.bf16.gmra.mxu0 %v822
        %v1800 = vpop.f32.mrf.mxu0
        %v1801 = vadd.f32 %v917, %v1800
        %v1802 = vpop.f32.mrf.mxu0
        %v1803 = vadd.f32 %v917, %v1802
        %1804 = vmatmul.bf16.gmra.mxu0 %v824
        %v1805 = vpop.f32.mrf.mxu0
        %v1806 = vadd.f32 %v917, %v1805
        %v1807 = vpop.f32.mrf.mxu0
        %v1808 = vadd.f32 %v917, %v1807
        %1809 = vmatmul.bf16.gmra.mxu0 %v826
        %v1810 = vpop.f32.mrf.mxu0
        %v1811 = vadd.f32 %v917, %v1810
        %v1812 = vpop.f32.mrf.mxu0
        %v1813 = vadd.f32 %v917, %v1812
        %1814 = vmatmul.bf16.gmra.mxu0 %v828
        %v1815 = vpop.f32.mrf.mxu0
        %v1816 = vadd.f32 %v917, %v1815
        %v1817 = vpop.f32.mrf.mxu0
        %v1818 = vadd.f32 %v917, %v1817
        %1819 = vmatmul.bf16.gmra.mxu0 %v830
        %v1820 = vpop.f32.mrf.mxu0
        %v1821 = vadd.f32 %v917, %v1820
        %v1822 = vpop.f32.mrf.mxu0
        %v1823 = vadd.f32 %v917, %v1822
        %1824 = vmatmul.bf16.gmra.mxu0 %v832
        %v1825 = vpop.f32.mrf.mxu0
        %v1826 = vadd.f32 %v917, %v1825
        %v1827 = vpop.f32.mrf.mxu0
        %v1828 = vadd.f32 %v917, %v1827
        %1829 = vmatmul.bf16.gmra.mxu0 %v834
        %v1830 = vpop.f32.mrf.mxu0
        %v1831 = vadd.f32 %v917, %v1830
        %v1832 = vpop.f32.mrf.mxu0
        %v1833 = vadd.f32 %v917, %v1832
        %1834 = vmatmul.bf16.gmra.mxu0 %v836
        %v1835 = vpop.f32.mrf.mxu0
        %v1836 = vadd.f32 %v917, %v1835
        %v1837 = vpop.f32.mrf.mxu0
        %v1838 = vadd.f32 %v917, %v1837
        %1839 = vmatmul.bf16.gmra.mxu0 %v838
        %v1840 = vpop.f32.mrf.mxu0
        %v1841 = vadd.f32 %v917, %v1840
        %v1842 = vpop.f32.mrf.mxu0
        %v1843 = vadd.f32 %v917, %v1842
        %1844 = vmatmul.bf16.gmra.mxu0 %v840
        %v1845 = vpop.f32.mrf.mxu0
        %v1846 = vadd.f32 %v917, %v1845
        %v1847 = vpop.f32.mrf.mxu0
        %v1848 = vadd.f32 %v917, %v1847
        %1849 = vmatmul.bf16.gmra.mxu0 %v842
        %v1850 = vpop.f32.mrf.mxu0
        %v1851 = vadd.f32 %v917, %v1850
        %v1852 = vpop.f32.mrf.mxu0
        %v1853 = vadd.f32 %v917, %v1852
        %1854 = vmatmul.bf16.gmra.mxu0 %v844
        %v1855 = vpop.f32.mrf.mxu0
        %v1856 = vadd.f32 %v917, %v1855
        %v1857 = vpop.f32.mrf.mxu0
        %v1858 = vadd.f32 %v917, %v1857
        %1859 = vmatmul.bf16.gmra.mxu0 %v846
        %v1860 = vpop.f32.mrf.mxu0
        %v1861 = vadd.f32 %v917, %v1860
        %v1862 = vpop.f32.mrf.mxu0
        %v1863 = vadd.f32 %v917, %v1862
        %1864 = vdwg.mxu0
        %1865 = vmatpush.bf16.msra.mxu0 %v1177
        %1866 = vmatpush.bf16.msra.mxu0 %v1173
        %1867 = vmatpush.bf16.msra.mxu0 %v1169
        %1868 = vmatpush.bf16.msra.mxu0 %v1165
        %1869 = vmatpush.bf16.msra.mxu0 %v1161
        %1870 = vmatpush.bf16.msra.mxu0 %v1157
        %1871 = vmatpush.bf16.msra.mxu0 %v1153
        %1872 = vmatpush.bf16.msra.mxu0 %v1149
        %1873 = vmatmul.bf16.gmra.mxu0 %v817
        %v1874 = vpop.f32.mrf.mxu0
        %v1875 = vadd.f32 %v1786, %v1874
        %v1876 = vpop.f32.mrf.mxu0
        %v1877 = vadd.f32 %v1788, %v1876
        %1878 = vmatmul.bf16.gmra.mxu0 %v819
        %v1879 = vpop.f32.mrf.mxu0
        %v1880 = vadd.f32 %v1791, %v1879
        %v1881 = vpop.f32.mrf.mxu0
        %v1882 = vadd.f32 %v1793, %v1881
        %1883 = vmatmul.bf16.gmra.mxu0 %v821
        %v1884 = vpop.f32.mrf.mxu0
        %v1885 = vadd.f32 %v1796, %v1884
        %v1886 = vpop.f32.mrf.mxu0
        %v1887 = vadd.f32 %v1798, %v1886
        %1888 = vmatmul.bf16.gmra.mxu0 %v823
        %v1889 = vpop.f32.mrf.mxu0
        %v1890 = vadd.f32 %v1801, %v1889
        %v1891 = vpop.f32.mrf.mxu0
        %v1892 = vadd.f32 %v1803, %v1891
        %1893 = vmatmul.bf16.gmra.mxu0 %v825
        %v1894 = vpop.f32.mrf.mxu0
        %v1895 = vadd.f32 %v1806, %v1894
        %v1896 = vpop.f32.mrf.mxu0
        %v1897 = vadd.f32 %v1808, %v1896
        %1898 = vmatmul.bf16.gmra.mxu0 %v827
        %v1899 = vpop.f32.mrf.mxu0
        %v1900 = vadd.f32 %v1811, %v1899
        %v1901 = vpop.f32.mrf.mxu0
        %v1902 = vadd.f32 %v1813, %v1901
        %1903 = vmatmul.bf16.gmra.mxu0 %v829
        %v1904 = vpop.f32.mrf.mxu0
        %v1905 = vadd.f32 %v1816, %v1904
        %v1906 = vpop.f32.mrf.mxu0
        %v1907 = vadd.f32 %v1818, %v1906
        %1908 = vmatmul.bf16.gmra.mxu0 %v831
        %v1909 = vpop.f32.mrf.mxu0
        %v1910 = vadd.f32 %v1821, %v1909
        %v1911 = vpop.f32.mrf.mxu0
        %v1912 = vadd.f32 %v1823, %v1911
        %1913 = vmatmul.bf16.gmra.mxu0 %v833
        %v1914 = vpop.f32.mrf.mxu0
        %v1915 = vadd.f32 %v1826, %v1914
        %v1916 = vpop.f32.mrf.mxu0
        %v1917 = vadd.f32 %v1828, %v1916
        %1918 = vmatmul.bf16.gmra.mxu0 %v835
        %v1919 = vpop.f32.mrf.mxu0
        %v1920 = vadd.f32 %v1831, %v1919
        %v1921 = vpop.f32.mrf.mxu0
        %v1922 = vadd.f32 %v1833, %v1921
        %1923 = vmatmul.bf16.gmra.mxu0 %v837
        %v1924 = vpop.f32.mrf.mxu0
        %v1925 = vadd.f32 %v1836, %v1924
        %v1926 = vpop.f32.mrf.mxu0
        %v1927 = vadd.f32 %v1838, %v1926
        %1928 = vmatmul.bf16.gmra.mxu0 %v839
        %v1929 = vpop.f32.mrf.mxu0
        %v1930 = vadd.f32 %v1841, %v1929
        %v1931 = vpop.f32.mrf.mxu0
        %v1932 = vadd.f32 %v1843, %v1931
        %1933 = vmatmul.bf16.gmra.mxu0 %v841
        %v1934 = vpop.f32.mrf.mxu0
        %v1935 = vadd.f32 %v1846, %v1934
        %v1936 = vpop.f32.mrf.mxu0
        %v1937 = vadd.f32 %v1848, %v1936
        %1938 = vmatmul.bf16.gmra.mxu0 %v843
        %v1939 = vpop.f32.mrf.mxu0
        %v1940 = vadd.f32 %v1851, %v1939
        %v1941 = vpop.f32.mrf.mxu0
        %v1942 = vadd.f32 %v1853, %v1941
        %1943 = vmatmul.bf16.gmra.mxu0 %v845
        %v1944 = vpop.f32.mrf.mxu0
        %v1945 = vadd.f32 %v1856, %v1944
        %v1946 = vpop.f32.mrf.mxu0
        %v1947 = vadd.f32 %v1858, %v1946
        %1948 = vmatmul.bf16.gmra.mxu0 %v847
        %v1949 = vpop.f32.mrf.mxu0
        %v1950 = vadd.f32 %v1861, %v1949
        %v1951 = vpop.f32.mrf.mxu0
        %v1952 = vadd.f32 %v1863, %v1951
        %1953 = vdwg.mxu0
        %v1954 = vmax.f32 %v1341, 0.0
        %v1955 = vmax.f32 %v1519, 0.0
        %v1956 = vmax.f32 %v1697, 0.0
        %v1957 = vmax.f32 %v1875, 0.0
        %v1958 = vmax.f32 %v1343, 0.0
        %v1959 = vmax.f32 %v1521, 0.0
        %v1960 = vmax.f32 %v1699, 0.0
        %v1961 = vmax.f32 %v1877, 0.0
        %v1962 = vmax.f32 %v1346, 0.0
        %v1963 = vmax.f32 %v1524, 0.0
        %v1964 = vmax.f32 %v1702, 0.0
        %v1965 = vmax.f32 %v1880, 0.0
        %v1966 = vmax.f32 %v1348, 0.0
        %v1967 = vmax.f32 %v1526, 0.0
        %v1968 = vmax.f32 %v1704, 0.0
        %v1969 = vmax.f32 %v1882, 0.0
        %v1970 = vmax.f32 %v1351, 0.0
        %v1971 = vmax.f32 %v1529, 0.0
        %v1972 = vmax.f32 %v1707, 0.0
        %v1973 = vmax.f32 %v1885, 0.0
        %v1974 = vmax.f32 %v1353, 0.0
        %v1975 = vmax.f32 %v1531, 0.0
        %v1976 = vmax.f32 %v1709, 0.0
        %v1977 = vmax.f32 %v1887, 0.0
        %v1978 = vmax.f32 %v1356, 0.0
        %v1979 = vmax.f32 %v1534, 0.0
        %v1980 = vmax.f32 %v1712, 0.0
        %v1981 = vmax.f32 %v1890, 0.0
        %v1982 = vmax.f32 %v1358, 0.0
        %v1983 = vmax.f32 %v1536, 0.0
        %v1984 = vmax.f32 %v1714, 0.0
        %v1985 = vmax.f32 %v1892, 0.0
        %v1986 = vmax.f32 %v1361, 0.0
        %v1987 = vmax.f32 %v1539, 0.0
        %v1988 = vmax.f32 %v1717, 0.0
        %v1989 = vmax.f32 %v1895, 0.0
        %v1990 = vmax.f32 %v1363, 0.0
        %v1991 = vmax.f32 %v1541, 0.0
        %v1992 = vmax.f32 %v1719, 0.0
        %v1993 = vmax.f32 %v1897, 0.0
        %v1994 = vmax.f32 %v1366, 0.0
        %v1995 = vmax.f32 %v1544, 0.0
        %v1996 = vmax.f32 %v1722, 0.0
        %v1997 = vmax.f32 %v1900, 0.0
        %v1998 = vmax.f32 %v1368, 0.0
        %v1999 = vmax.f32 %v1546, 0.0
        %v2000 = vmax.f32 %v1724, 0.0
        %v2001 = vmax.f32 %v1902, 0.0
        %v2002 = vmax.f32 %v1371, 0.0
        %v2003 = vmax.f32 %v1549, 0.0
        %v2004 = vmax.f32 %v1727, 0.0
        %v2005 = vmax.f32 %v1905, 0.0
        %v2006 = vmax.f32 %v1373, 0.0
        %v2007 = vmax.f32 %v1551, 0.0
        %v2008 = vmax.f32 %v1729, 0.0
        %v2009 = vmax.f32 %v1907, 0.0
        %v2010 = vmax.f32 %v1376, 0.0
        %v2011 = vmax.f32 %v1554, 0.0
        %v2012 = vmax.f32 %v1732, 0.0
        %v2013 = vmax.f32 %v1910, 0.0
        %v2014 = vmax.f32 %v1378, 0.0
        %v2015 = vmax.f32 %v1556, 0.0
        %v2016 = vmax.f32 %v1734, 0.0
        %v2017 = vmax.f32 %v1912, 0.0
        %v2018 = vmax.f32 %v1381, 0.0
        %v2019 = vmax.f32 %v1559, 0.0
        %v2020 = vmax.f32 %v1737, 0.0
        %v2021 = vmax.f32 %v1915, 0.0
        %v2022 = vmax.f32 %v1383, 0.0
        %v2023 = vmax.f32 %v1561, 0.0
        %v2024 = vmax.f32 %v1739, 0.0
        %v2025 = vmax.f32 %v1917, 0.0
        %v2026 = vmax.f32 %v1386, 0.0
        %v2027 = vmax.f32 %v1564, 0.0
        %v2028 = vmax.f32 %v1742, 0.0
        %v2029 = vmax.f32 %v1920, 0.0
        %v2030 = vmax.f32 %v1388, 0.0
        %v2031 = vmax.f32 %v1566, 0.0
        %v2032 = vmax.f32 %v1744, 0.0
        %v2033 = vmax.f32 %v1922, 0.0
        %v2034 = vmax.f32 %v1391, 0.0
        %v2035 = vmax.f32 %v1569, 0.0
        %v2036 = vmax.f32 %v1747, 0.0
        %v2037 = vmax.f32 %v1925, 0.0
        %v2038 = vmax.f32 %v1393, 0.0
        %v2039 = vmax.f32 %v1571, 0.0
        %v2040 = vmax.f32 %v1749, 0.0
        %v2041 = vmax.f32 %v1927, 0.0
        %v2042 = vmax.f32 %v1396, 0.0
        %v2043 = vmax.f32 %v1574, 0.0
        %v2044 = vmax.f32 %v1752, 0.0
        %v2045 = vmax.f32 %v1930, 0.0
        %v2046 = vmax.f32 %v1398, 0.0
        %v2047 = vmax.f32 %v1576, 0.0
        %v2048 = vmax.f32 %v1754, 0.0
        %v2049 = vmax.f32 %v1932, 0.0
        %v2050 = vmax.f32 %v1401, 0.0
        %v2051 = vmax.f32 %v1579, 0.0
        %v2052 = vmax.f32 %v1757, 0.0
        %v2053 = vmax.f32 %v1935, 0.0
        %v2054 = vmax.f32 %v1403, 0.0
        %v2055 = vmax.f32 %v1581, 0.0
        %v2056 = vmax.f32 %v1759, 0.0
        %v2057 = vmax.f32 %v1937, 0.0
        %v2058 = vmax.f32 %v1406, 0.0
        %v2059 = vmax.f32 %v1584, 0.0
        %v2060 = vmax.f32 %v1762, 0.0
        %v2061 = vmax.f32 %v1940, 0.0
        %v2062 = vmax.f32 %v1408, 0.0
        %v2063 = vmax.f32 %v1586, 0.0
        %v2064 = vmax.f32 %v1764, 0.0
        %v2065 = vmax.f32 %v1942, 0.0
        %v2066 = vmax.f32 %v1411, 0.0
        %v2067 = vmax.f32 %v1589, 0.0
        %v2068 = vmax.f32 %v1767, 0.0
        %v2069 = vmax.f32 %v1945, 0.0
        %v2070 = vmax.f32 %v1413, 0.0
        %v2071 = vmax.f32 %v1591, 0.0
        %v2072 = vmax.f32 %v1769, 0.0
        %v2073 = vmax.f32 %v1947, 0.0
        %v2074 = vmax.f32 %v1416, 0.0
        %v2075 = vmax.f32 %v1594, 0.0
        %v2076 = vmax.f32 %v1772, 0.0
        %v2077 = vmax.f32 %v1950, 0.0
        %v2078 = vmax.f32 %v1418, 0.0
        %v2079 = vmax.f32 %v1596, 0.0
        %v2080 = vmax.f32 %v1774, 0.0
        %v2081 = vmax.f32 %v1952, 0.0
        %v2082 = vpack.c.bf16 %v1958, %v1954
        %v2083 = vpack.c.bf16 %v1959, %v1955
        %v2084 = vpack.c.bf16 %v1960, %v1956
        %v2085 = vpack.c.bf16 %v1961, %v1957
        %v2086 = vpack.c.bf16 %v1966, %v1962
        %v2087 = vpack.c.bf16 %v1967, %v1963
        %v2088 = vpack.c.bf16 %v1968, %v1964
        %v2089 = vpack.c.bf16 %v1969, %v1965
        %v2090 = vpack.c.bf16 %v1974, %v1970
        %v2091 = vpack.c.bf16 %v1975, %v1971
        %v2092 = vpack.c.bf16 %v1976, %v1972
        %v2093 = vpack.c.bf16 %v1977, %v1973
        %v2094 = vpack.c.bf16 %v1982, %v1978
        %v2095 = vpack.c.bf16 %v1983, %v1979
        %v2096 = vpack.c.bf16 %v1984, %v1980
        %v2097 = vpack.c.bf16 %v1985, %v1981
        %v2098 = vpack.c.bf16 %v1990, %v1986
        %v2099 = vpack.c.bf16 %v1991, %v1987
        %v2100 = vpack.c.bf16 %v1992, %v1988
        %v2101 = vpack.c.bf16 %v1993, %v1989
        %v2102 = vpack.c.bf16 %v1998, %v1994
        %v2103 = vpack.c.bf16 %v1999, %v1995
        %v2104 = vpack.c.bf16 %v2000, %v1996
        %v2105 = vpack.c.bf16 %v2001, %v1997
        %v2106 = vpack.c.bf16 %v2006, %v2002
        %v2107 = vpack.c.bf16 %v2007, %v2003
        %v2108 = vpack.c.bf16 %v2008, %v2004
        %v2109 = vpack.c.bf16 %v2009, %v2005
        %v2110 = vpack.c.bf16 %v2014, %v2010
        %v2111 = vpack.c.bf16 %v2015, %v2011
        %v2112 = vpack.c.bf16 %v2016, %v2012
        %v2113 = vpack.c.bf16 %v2017, %v2013
        %v2114 = vpack.c.bf16 %v2022, %v2018
        %v2115 = vpack.c.bf16 %v2023, %v2019
        %v2116 = vpack.c.bf16 %v2024, %v2020
        %v2117 = vpack.c.bf16 %v2025, %v2021
        %v2118 = vpack.c.bf16 %v2030, %v2026
        %v2119 = vpack.c.bf16 %v2031, %v2027
        %v2120 = vpack.c.bf16 %v2032, %v2028
        %v2121 = vpack.c.bf16 %v2033, %v2029
        %v2122 = vpack.c.bf16 %v2038, %v2034
        %v2123 = vpack.c.bf16 %v2039, %v2035
        %v2124 = vpack.c.bf16 %v2040, %v2036
        %v2125 = vpack.c.bf16 %v2041, %v2037
        %v2126 = vpack.c.bf16 %v2046, %v2042
        %v2127 = vpack.c.bf16 %v2047, %v2043
        %v2128 = vpack.c.bf16 %v2048, %v2044
        %v2129 = vpack.c.bf16 %v2049, %v2045
        %v2130 = vpack.c.bf16 %v2054, %v2050
        %v2131 = vpack.c.bf16 %v2055, %v2051
        %v2132 = vpack.c.bf16 %v2056, %v2052
        %v2133 = vpack.c.bf16 %v2057, %v2053
        %v2134 = vpack.c.bf16 %v2062, %v2058
        %v2135 = vpack.c.bf16 %v2063, %v2059
        %v2136 = vpack.c.bf16 %v2064, %v2060
        %v2137 = vpack.c.bf16 %v2065, %v2061
        %v2138 = vpack.c.bf16 %v2070, %v2066
        %v2139 = vpack.c.bf16 %v2071, %v2067
        %v2140 = vpack.c.bf16 %v2072, %v2068
        %v2141 = vpack.c.bf16 %v2073, %v2069
        %v2142 = vpack.c.bf16 %v2078, %v2074
        %v2143 = vpack.c.bf16 %v2079, %v2075
        %v2144 = vpack.c.bf16 %v2080, %v2076
        %v2145 = vpack.c.bf16 %v2081, %v2077
        %v2146 = vld [vmem:[%s365] sm:$0xf]
        %v2147 = vld [vmem:[%s365 + $0x4] sm:$0xf]
        %v2148 = vld [vmem:[%s365 + $0x8] sm:$0xf]
        %v2149 = vld [vmem:[%s365 + $0xc] sm:$0xf]
        %v2150 = vld [vmem:[%s365 + $0x10] sm:$0xf]
        %v2151 = vld [vmem:[%s365 + $0x14] sm:$0xf]
        %v2152 = vld [vmem:[%s365 + $0x18] sm:$0xf]
        %v2153 = vld [vmem:[%s365 + $0x1c] sm:$0xf]
        %v2154 = vld [vmem:[%s365 + $0x20] sm:$0xf]
        %v2155 = vld [vmem:[%s365 + $0x24] sm:$0xf]
        %v2156 = vld [vmem:[%s365 + $0x28] sm:$0xf]
        %v2157 = vld [vmem:[%s365 + $0x2c] sm:$0xf]
        %v2158 = vld [vmem:[%s365 + $0x30] sm:$0xf]
        %v2159 = vld [vmem:[%s365 + $0x34] sm:$0xf]
        %v2160 = vld [vmem:[%s365 + $0x38] sm:$0xf]
        %v2161 = vld [vmem:[%s365 + $0x3c] sm:$0xf]
        %v2162 = vld [vmem:[%s365 + $0x40] sm:$0xf]
        %v2163 = vld [vmem:[%s365 + $0x44] sm:$0xf]
        %v2164 = vld [vmem:[%s365 + $0x48] sm:$0xf]
        %v2165 = vld [vmem:[%s365 + $0x4c] sm:$0xf]
        %v2166 = vld [vmem:[%s365 + $0x50] sm:$0xf]
        %v2167 = vld [vmem:[%s365 + $0x54] sm:$0xf]
        %v2168 = vld [vmem:[%s365 + $0x58] sm:$0xf]
        %v2169 = vld [vmem:[%s365 + $0x5c] sm:$0xf]
        %v2170 = vld [vmem:[%s365 + $0x60] sm:$0xf]
        %v2171 = vld [vmem:[%s365 + $0x64] sm:$0xf]
        %v2172 = vld [vmem:[%s365 + $0x68] sm:$0xf]
        %v2173 = vld [vmem:[%s365 + $0x6c] sm:$0xf]
        %v2174 = vld [vmem:[%s365 + $0x70] sm:$0xf]
        %v2175 = vld [vmem:[%s365 + $0x74] sm:$0xf]
        %v2176 = vld [vmem:[%s365 + $0x78] sm:$0xf]
        %v2177 = vld [vmem:[%s365 + $0x7c] sm:$0xf]
        %v2178 = vld [vmem:[%s365 + $0x80] sm:$0xf]
        %v2179 = vld [vmem:[%s365 + $0x84] sm:$0xf]
        %v2180 = vld [vmem:[%s365 + $0x88] sm:$0xf]
        %v2181 = vld [vmem:[%s365 + $0x8c] sm:$0xf]
        %v2182 = vld [vmem:[%s365 + $0x90] sm:$0xf]
        %v2183 = vld [vmem:[%s365 + $0x94] sm:$0xf]
        %v2184 = vld [vmem:[%s365 + $0x98] sm:$0xf]
        %v2185 = vld [vmem:[%s365 + $0x9c] sm:$0xf]
        %v2186 = vld [vmem:[%s365 + $0xa0] sm:$0xf]
        %v2187 = vld [vmem:[%s365 + $0xa4] sm:$0xf]
        %v2188 = vld [vmem:[%s365 + $0xa8] sm:$0xf]
        %v2189 = vld [vmem:[%s365 + $0xac] sm:$0xf]
        %v2190 = vld [vmem:[%s365 + $0xb0] sm:$0xf]
        %v2191 = vld [vmem:[%s365 + $0xb4] sm:$0xf]
        %v2192 = vld [vmem:[%s365 + $0xb8] sm:$0xf]
        %v2193 = vld [vmem:[%s365 + $0xbc] sm:$0xf]
        %v2194 = vld [vmem:[%s365 + $0xc0] sm:$0xf]
        %v2195 = vld [vmem:[%s365 + $0xc4] sm:$0xf]
        %v2196 = vld [vmem:[%s365 + $0xc8] sm:$0xf]
        %v2197 = vld [vmem:[%s365 + $0xcc] sm:$0xf]
        %v2198 = vld [vmem:[%s365 + $0xd0] sm:$0xf]
        %v2199 = vld [vmem:[%s365 + $0xd4] sm:$0xf]
        %v2200 = vld [vmem:[%s365 + $0xd8] sm:$0xf]
        %v2201 = vld [vmem:[%s365 + $0xdc] sm:$0xf]
        %v2202 = vld [vmem:[%s365 + $0xe0] sm:$0xf]
        %v2203 = vld [vmem:[%s365 + $0xe4] sm:$0xf]
        %v2204 = vld [vmem:[%s365 + $0xe8] sm:$0xf]
        %v2205 = vld [vmem:[%s365 + $0xec] sm:$0xf]
        %v2206 = vld [vmem:[%s365 + $0xf0] sm:$0xf]
        %v2207 = vld [vmem:[%s365 + $0xf4] sm:$0xf]
        %v2208 = vld [vmem:[%s365 + $0xf8] sm:$0xf]
        %v2209 = vld [vmem:[%s365 + $0xfc] sm:$0xf]
        %v2210 = vld [vmem:[%s444] sm:$0x1]
        %v2212 = vperm.slane %v2210, 0
        %v2278 = vunpack.c.l.b16 %v2146
        %v2279 = vunpack.c.l.b16 %v2147
        %v2280 = vunpack.c.l.b16 %v2148
        %v2281 = vunpack.c.l.b16 %v2149
        %v2282 = vunpack.c.l.b16 %v2150
        %v2283 = vunpack.c.l.b16 %v2151
        %v2284 = vunpack.c.l.b16 %v2152
        %v2285 = vunpack.c.l.b16 %v2153
        %v2286 = vunpack.c.l.b16 %v2154
        %v2287 = vunpack.c.l.b16 %v2155
        %v2288 = vunpack.c.l.b16 %v2156
        %v2289 = vunpack.c.l.b16 %v2157
        %v2290 = vunpack.c.l.b16 %v2158
        %v2291 = vunpack.c.l.b16 %v2159
        %v2292 = vunpack.c.l.b16 %v2160
        %v2293 = vunpack.c.l.b16 %v2161
        %v2294 = vunpack.c.l.b16 %v2162
        %v2295 = vunpack.c.l.b16 %v2163
        %v2296 = vunpack.c.l.b16 %v2164
        %v2297 = vunpack.c.l.b16 %v2165
        %v2298 = vunpack.c.l.b16 %v2166
        %v2299 = vunpack.c.l.b16 %v2167
        %v2300 = vunpack.c.l.b16 %v2168
        %v2301 = vunpack.c.l.b16 %v2169
        %v2302 = vunpack.c.l.b16 %v2170
        %v2303 = vunpack.c.l.b16 %v2171
        %v2304 = vunpack.c.l.b16 %v2172
        %v2305 = vunpack.c.l.b16 %v2173
        %v2306 = vunpack.c.l.b16 %v2174
        %v2307 = vunpack.c.l.b16 %v2175
        %v2308 = vunpack.c.l.b16 %v2176
        %v2309 = vunpack.c.l.b16 %v2177
        %v2310 = vunpack.c.l.b16 %v2178
        %v2311 = vunpack.c.l.b16 %v2179
        %v2312 = vunpack.c.l.b16 %v2180
        %v2313 = vunpack.c.l.b16 %v2181
        %v2314 = vunpack.c.l.b16 %v2182
        %v2315 = vunpack.c.l.b16 %v2183
        %v2316 = vunpack.c.l.b16 %v2184
        %v2317 = vunpack.c.l.b16 %v2185
        %v2318 = vunpack.c.l.b16 %v2186
        %v2319 = vunpack.c.l.b16 %v2187
        %v2320 = vunpack.c.l.b16 %v2188
        %v2321 = vunpack.c.l.b16 %v2189
        %v2322 = vunpack.c.l.b16 %v2190
        %v2323 = vunpack.c.l.b16 %v2191
        %v2324 = vunpack.c.l.b16 %v2192
        %v2325 = vunpack.c.l.b16 %v2193
        %v2326 = vunpack.c.l.b16 %v2194
        %v2327 = vunpack.c.l.b16 %v2195
        %v2328 = vunpack.c.l.b16 %v2196
        %v2329 = vunpack.c.l.b16 %v2197
        %v2330 = vunpack.c.l.b16 %v2198
        %v2331 = vunpack.c.l.b16 %v2199
        %v2332 = vunpack.c.l.b16 %v2200
        %v2333 = vunpack.c.l.b16 %v2201
        %v2334 = vunpack.c.l.b16 %v2202
        %v2335 = vunpack.c.l.b16 %v2203
        %v2336 = vunpack.c.l.b16 %v2204
        %v2337 = vunpack.c.l.b16 %v2205
        %v2338 = vunpack.c.l.b16 %v2206
        %v2339 = vunpack.c.l.b16 %v2207
        %v2340 = vunpack.c.l.b16 %v2208
        %v2341 = vunpack.c.l.b16 %v2209
        %v2342 = vpack.c.b16 %v2279, %v2278
        %v2343 = vpack.c.b16 %v2281, %v2280
        %v2344 = vpack.c.b16 %v2283, %v2282
        %v2345 = vpack.c.b16 %v2285, %v2284
        %v2346 = vpack.c.b16 %v2287, %v2286
        %v2347 = vpack.c.b16 %v2289, %v2288
        %v2348 = vpack.c.b16 %v2291, %v2290
        %v2349 = vpack.c.b16 %v2293, %v2292
        %v2350 = vpack.c.b16 %v2295, %v2294
        %v2351 = vpack.c.b16 %v2297, %v2296
        %v2352 = vpack.c.b16 %v2299, %v2298
        %v2353 = vpack.c.b16 %v2301, %v2300
        %v2354 = vpack.c.b16 %v2303, %v2302
        %v2355 = vpack.c.b16 %v2305, %v2304
        %v2356 = vpack.c.b16 %v2307, %v2306
        %v2357 = vpack.c.b16 %v2309, %v2308
        %v2358 = vpack.c.b16 %v2311, %v2310
        %v2359 = vpack.c.b16 %v2313, %v2312
        %v2360 = vpack.c.b16 %v2315, %v2314
        %v2361 = vpack.c.b16 %v2317, %v2316
        %v2362 = vpack.c.b16 %v2319, %v2318
        %v2363 = vpack.c.b16 %v2321, %v2320
        %v2364 = vpack.c.b16 %v2323, %v2322
        %v2365 = vpack.c.b16 %v2325, %v2324
        %v2366 = vpack.c.b16 %v2327, %v2326
        %v2367 = vpack.c.b16 %v2329, %v2328
        %v2368 = vpack.c.b16 %v2331, %v2330
        %v2369 = vpack.c.b16 %v2333, %v2332
        %v2370 = vpack.c.b16 %v2335, %v2334
        %v2371 = vpack.c.b16 %v2337, %v2336
        %v2372 = vpack.c.b16 %v2339, %v2338
        %v2373 = vpack.c.b16 %v2341, %v2340
        %2406 = vmatpush.bf16.msra.mxu0 %v2349
        %2407 = vmatpush.bf16.msra.mxu0 %v2348
        %2408 = vmatpush.bf16.msra.mxu0 %v2347
        %2409 = vmatpush.bf16.msra.mxu0 %v2346
        %2410 = vmatpush.bf16.msra.mxu0 %v2345
        %2411 = vmatpush.bf16.msra.mxu0 %v2344
        %2412 = vmatpush.bf16.msra.mxu0 %v2343
        %2413 = vmatpush.bf16.msra.mxu0 %v2342
        %2414 = vmatmul.bf16.gmra.mxu0 %v2082
        %v2415 = vpop.f32.mrf.mxu0
        %v2416 = vadd.f32 %v2212, %v2415
        %v2417 = vpop.f32.mrf.mxu0
        %v2418 = vadd.f32 %v2212, %v2417
        %2419 = vmatmul.bf16.gmra.mxu0 %v2086
        %v2420 = vpop.f32.mrf.mxu0
        %v2421 = vadd.f32 %v2212, %v2420
        %v2422 = vpop.f32.mrf.mxu0
        %v2423 = vadd.f32 %v2212, %v2422
        %2424 = vmatmul.bf16.gmra.mxu0 %v2090
        %v2425 = vpop.f32.mrf.mxu0
        %v2426 = vadd.f32 %v2212, %v2425
        %v2427 = vpop.f32.mrf.mxu0
        %v2428 = vadd.f32 %v2212, %v2427
        %2429 = vmatmul.bf16.gmra.mxu0 %v2094
        %v2430 = vpop.f32.mrf.mxu0
        %v2431 = vadd.f32 %v2212, %v2430
        %v2432 = vpop.f32.mrf.mxu0
        %v2433 = vadd.f32 %v2212, %v2432
        %2434 = vmatmul.bf16.gmra.mxu0 %v2098
        %v2435 = vpop.f32.mrf.mxu0
        %v2436 = vadd.f32 %v2212, %v2435
        %v2437 = vpop.f32.mrf.mxu0
        %v2438 = vadd.f32 %v2212, %v2437
        %2439 = vmatmul.bf16.gmra.mxu0 %v2102
        %v2440 = vpop.f32.mrf.mxu0
        %v2441 = vadd.f32 %v2212, %v2440
        %v2442 = vpop.f32.mrf.mxu0
        %v2443 = vadd.f32 %v2212, %v2442
        %2444 = vmatmul.bf16.gmra.mxu0 %v2106
        %v2445 = vpop.f32.mrf.mxu0
        %v2446 = vadd.f32 %v2212, %v2445
        %v2447 = vpop.f32.mrf.mxu0
        %v2448 = vadd.f32 %v2212, %v2447
        %2449 = vmatmul.bf16.gmra.mxu0 %v2110
        %v2450 = vpop.f32.mrf.mxu0
        %v2451 = vadd.f32 %v2212, %v2450
        %v2452 = vpop.f32.mrf.mxu0
        %v2453 = vadd.f32 %v2212, %v2452
        %2454 = vmatmul.bf16.gmra.mxu0 %v2114
        %v2455 = vpop.f32.mrf.mxu0
        %v2456 = vadd.f32 %v2212, %v2455
        %v2457 = vpop.f32.mrf.mxu0
        %v2458 = vadd.f32 %v2212, %v2457
        %2459 = vmatmul.bf16.gmra.mxu0 %v2118
        %v2460 = vpop.f32.mrf.mxu0
        %v2461 = vadd.f32 %v2212, %v2460
        %v2462 = vpop.f32.mrf.mxu0
        %v2463 = vadd.f32 %v2212, %v2462
        %2464 = vmatmul.bf16.gmra.mxu0 %v2122
        %v2465 = vpop.f32.mrf.mxu0
        %v2466 = vadd.f32 %v2212, %v2465
        %v2467 = vpop.f32.mrf.mxu0
        %v2468 = vadd.f32 %v2212, %v2467
        %2469 = vmatmul.bf16.gmra.mxu0 %v2126
        %v2470 = vpop.f32.mrf.mxu0
        %v2471 = vadd.f32 %v2212, %v2470
        %v2472 = vpop.f32.mrf.mxu0
        %v2473 = vadd.f32 %v2212, %v2472
        %2474 = vmatmul.bf16.gmra.mxu0 %v2130
        %v2475 = vpop.f32.mrf.mxu0
        %v2476 = vadd.f32 %v2212, %v2475
        %v2477 = vpop.f32.mrf.mxu0
        %v2478 = vadd.f32 %v2212, %v2477
        %2479 = vmatmul.bf16.gmra.mxu0 %v2134
        %v2480 = vpop.f32.mrf.mxu0
        %v2481 = vadd.f32 %v2212, %v2480
        %v2482 = vpop.f32.mrf.mxu0
        %v2483 = vadd.f32 %v2212, %v2482
        %2484 = vmatmul.bf16.gmra.mxu0 %v2138
        %v2485 = vpop.f32.mrf.mxu0
        %v2486 = vadd.f32 %v2212, %v2485
        %v2487 = vpop.f32.mrf.mxu0
        %v2488 = vadd.f32 %v2212, %v2487
        %2489 = vmatmul.bf16.gmra.mxu0 %v2142
        %v2490 = vpop.f32.mrf.mxu0
        %v2491 = vadd.f32 %v2212, %v2490
        %v2492 = vpop.f32.mrf.mxu0
        %v2493 = vadd.f32 %v2212, %v2492
        %2494 = vdwg.mxu0
        %2495 = vmatpush.bf16.msra.mxu0 %v2357
        %2496 = vmatpush.bf16.msra.mxu0 %v2356
        %2497 = vmatpush.bf16.msra.mxu0 %v2355
        %2498 = vmatpush.bf16.msra.mxu0 %v2354
        %2499 = vmatpush.bf16.msra.mxu0 %v2353
        %2500 = vmatpush.bf16.msra.mxu0 %v2352
        %2501 = vmatpush.bf16.msra.mxu0 %v2351
        %2502 = vmatpush.bf16.msra.mxu0 %v2350
        %2503 = vmatmul.bf16.gmra.mxu0 %v2083
        %v2504 = vpop.f32.mrf.mxu0
        %v2505 = vadd.f32 %v2416, %v2504
        %v2506 = vpop.f32.mrf.mxu0
        %v2507 = vadd.f32 %v2418, %v2506
        %2508 = vmatmul.bf16.gmra.mxu0 %v2087
        %v2509 = vpop.f32.mrf.mxu0
        %v2510 = vadd.f32 %v2421, %v2509
        %v2511 = vpop.f32.mrf.mxu0
        %v2512 = vadd.f32 %v2423, %v2511
        %2513 = vmatmul.bf16.gmra.mxu0 %v2091
        %v2514 = vpop.f32.mrf.mxu0
        %v2515 = vadd.f32 %v2426, %v2514
        %v2516 = vpop.f32.mrf.mxu0
        %v2517 = vadd.f32 %v2428, %v2516
        %2518 = vmatmul.bf16.gmra.mxu0 %v2095
        %v2519 = vpop.f32.mrf.mxu0
        %v2520 = vadd.f32 %v2431, %v2519
        %v2521 = vpop.f32.mrf.mxu0
        %v2522 = vadd.f32 %v2433, %v2521
        %2523 = vmatmul.bf16.gmra.mxu0 %v2099
        %v2524 = vpop.f32.mrf.mxu0
        %v2525 = vadd.f32 %v2436, %v2524
        %v2526 = vpop.f32.mrf.mxu0
        %v2527 = vadd.f32 %v2438, %v2526
        %2528 = vmatmul.bf16.gmra.mxu0 %v2103
        %v2529 = vpop.f32.mrf.mxu0
        %v2530 = vadd.f32 %v2441, %v2529
        %v2531 = vpop.f32.mrf.mxu0
        %v2532 = vadd.f32 %v2443, %v2531
        %2533 = vmatmul.bf16.gmra.mxu0 %v2107
        %v2534 = vpop.f32.mrf.mxu0
        %v2535 = vadd.f32 %v2446, %v2534
        %v2536 = vpop.f32.mrf.mxu0
        %v2537 = vadd.f32 %v2448, %v2536
        %2538 = vmatmul.bf16.gmra.mxu0 %v2111
        %v2539 = vpop.f32.mrf.mxu0
        %v2540 = vadd.f32 %v2451, %v2539
        %v2541 = vpop.f32.mrf.mxu0
        %v2542 = vadd.f32 %v2453, %v2541
        %2543 = vmatmul.bf16.gmra.mxu0 %v2115
        %v2544 = vpop.f32.mrf.mxu0
        %v2545 = vadd.f32 %v2456, %v2544
        %v2546 = vpop.f32.mrf.mxu0
        %v2547 = vadd.f32 %v2458, %v2546
        %2548 = vmatmul.bf16.gmra.mxu0 %v2119
        %v2549 = vpop.f32.mrf.mxu0
        %v2550 = vadd.f32 %v2461, %v2549
        %v2551 = vpop.f32.mrf.mxu0
        %v2552 = vadd.f32 %v2463, %v2551
        %2553 = vmatmul.bf16.gmra.mxu0 %v2123
        %v2554 = vpop.f32.mrf.mxu0
        %v2555 = vadd.f32 %v2466, %v2554
        %v2556 = vpop.f32.mrf.mxu0
        %v2557 = vadd.f32 %v2468, %v2556
        %2558 = vmatmul.bf16.gmra.mxu0 %v2127
        %v2559 = vpop.f32.mrf.mxu0
        %v2560 = vadd.f32 %v2471, %v2559
        %v2561 = vpop.f32.mrf.mxu0
        %v2562 = vadd.f32 %v2473, %v2561
        %2563 = vmatmul.bf16.gmra.mxu0 %v2131
        %v2564 = vpop.f32.mrf.mxu0
        %v2565 = vadd.f32 %v2476, %v2564
        %v2566 = vpop.f32.mrf.mxu0
        %v2567 = vadd.f32 %v2478, %v2566
        %2568 = vmatmul.bf16.gmra.mxu0 %v2135
        %v2569 = vpop.f32.mrf.mxu0
        %v2570 = vadd.f32 %v2481, %v2569
        %v2571 = vpop.f32.mrf.mxu0
        %v2572 = vadd.f32 %v2483, %v2571
        %2573 = vmatmul.bf16.gmra.mxu0 %v2139
        %v2574 = vpop.f32.mrf.mxu0
        %v2575 = vadd.f32 %v2486, %v2574
        %v2576 = vpop.f32.mrf.mxu0
        %v2577 = vadd.f32 %v2488, %v2576
        %2578 = vmatmul.bf16.gmra.mxu0 %v2143
        %v2579 = vpop.f32.mrf.mxu0
        %v2580 = vadd.f32 %v2491, %v2579
        %v2581 = vpop.f32.mrf.mxu0
        %v2582 = vadd.f32 %v2493, %v2581
        %2583 = vdwg.mxu0
        %2584 = vmatpush.bf16.msra.mxu0 %v2365
        %2585 = vmatpush.bf16.msra.mxu0 %v2364
        %2586 = vmatpush.bf16.msra.mxu0 %v2363
        %2587 = vmatpush.bf16.msra.mxu0 %v2362
        %2588 = vmatpush.bf16.msra.mxu0 %v2361
        %2589 = vmatpush.bf16.msra.mxu0 %v2360
        %2590 = vmatpush.bf16.msra.mxu0 %v2359
        %2591 = vmatpush.bf16.msra.mxu0 %v2358
        %2592 = vmatmul.bf16.gmra.mxu0 %v2084
        %v2593 = vpop.f32.mrf.mxu0
        %v2594 = vadd.f32 %v2505, %v2593
        %v2595 = vpop.f32.mrf.mxu0
        %v2596 = vadd.f32 %v2507, %v2595
        %2597 = vmatmul.bf16.gmra.mxu0 %v2088
        %v2598 = vpop.f32.mrf.mxu0
        %v2599 = vadd.f32 %v2510, %v2598
        %v2600 = vpop.f32.mrf.mxu0
        %v2601 = vadd.f32 %v2512, %v2600
        %2602 = vmatmul.bf16.gmra.mxu0 %v2092
        %v2603 = vpop.f32.mrf.mxu0
        %v2604 = vadd.f32 %v2515, %v2603
        %v2605 = vpop.f32.mrf.mxu0
        %v2606 = vadd.f32 %v2517, %v2605
        %2607 = vmatmul.bf16.gmra.mxu0 %v2096
        %v2608 = vpop.f32.mrf.mxu0
        %v2609 = vadd.f32 %v2520, %v2608
        %v2610 = vpop.f32.mrf.mxu0
        %v2611 = vadd.f32 %v2522, %v2610
        %2612 = vmatmul.bf16.gmra.mxu0 %v2100
        %v2613 = vpop.f32.mrf.mxu0
        %v2614 = vadd.f32 %v2525, %v2613
        %v2615 = vpop.f32.mrf.mxu0
        %v2616 = vadd.f32 %v2527, %v2615
        %2617 = vmatmul.bf16.gmra.mxu0 %v2104
        %v2618 = vpop.f32.mrf.mxu0
        %v2619 = vadd.f32 %v2530, %v2618
        %v2620 = vpop.f32.mrf.mxu0
        %v2621 = vadd.f32 %v2532, %v2620
        %2622 = vmatmul.bf16.gmra.mxu0 %v2108
        %v2623 = vpop.f32.mrf.mxu0
        %v2624 = vadd.f32 %v2535, %v2623
        %v2625 = vpop.f32.mrf.mxu0
        %v2626 = vadd.f32 %v2537, %v2625
        %2627 = vmatmul.bf16.gmra.mxu0 %v2112
        %v2628 = vpop.f32.mrf.mxu0
        %v2629 = vadd.f32 %v2540, %v2628
        %v2630 = vpop.f32.mrf.mxu0
        %v2631 = vadd.f32 %v2542, %v2630
        %2632 = vmatmul.bf16.gmra.mxu0 %v2116
        %v2633 = vpop.f32.mrf.mxu0
        %v2634 = vadd.f32 %v2545, %v2633
        %v2635 = vpop.f32.mrf.mxu0
        %v2636 = vadd.f32 %v2547, %v2635
        %2637 = vmatmul.bf16.gmra.mxu0 %v2120
        %v2638 = vpop.f32.mrf.mxu0
        %v2639 = vadd.f32 %v2550, %v2638
        %v2640 = vpop.f32.mrf.mxu0
        %v2641 = vadd.f32 %v2552, %v2640
        %2642 = vmatmul.bf16.gmra.mxu0 %v2124
        %v2643 = vpop.f32.mrf.mxu0
        %v2644 = vadd.f32 %v2555, %v2643
        %v2645 = vpop.f32.mrf.mxu0
        %v2646 = vadd.f32 %v2557, %v2645
        %2647 = vmatmul.bf16.gmra.mxu0 %v2128
        %v2648 = vpop.f32.mrf.mxu0
        %v2649 = vadd.f32 %v2560, %v2648
        %v2650 = vpop.f32.mrf.mxu0
        %v2651 = vadd.f32 %v2562, %v2650
        %2652 = vmatmul.bf16.gmra.mxu0 %v2132
        %v2653 = vpop.f32.mrf.mxu0
        %v2654 = vadd.f32 %v2565, %v2653
        %v2655 = vpop.f32.mrf.mxu0
        %v2656 = vadd.f32 %v2567, %v2655
        %2657 = vmatmul.bf16.gmra.mxu0 %v2136
        %v2658 = vpop.f32.mrf.mxu0
        %v2659 = vadd.f32 %v2570, %v2658
        %v2660 = vpop.f32.mrf.mxu0
        %v2661 = vadd.f32 %v2572, %v2660
        %2662 = vmatmul.bf16.gmra.mxu0 %v2140
        %v2663 = vpop.f32.mrf.mxu0
        %v2664 = vadd.f32 %v2575, %v2663
        %v2665 = vpop.f32.mrf.mxu0
        %v2666 = vadd.f32 %v2577, %v2665
        %2667 = vmatmul.bf16.gmra.mxu0 %v2144
        %v2668 = vpop.f32.mrf.mxu0
        %v2669 = vadd.f32 %v2580, %v2668
        %v2670 = vpop.f32.mrf.mxu0
        %v2671 = vadd.f32 %v2582, %v2670
        %2672 = vdwg.mxu0
        %2673 = vmatpush.bf16.msra.mxu0 %v2373
        %2674 = vmatpush.bf16.msra.mxu0 %v2372
        %2675 = vmatpush.bf16.msra.mxu0 %v2371
        %2676 = vmatpush.bf16.msra.mxu0 %v2370
        %2677 = vmatpush.bf16.msra.mxu0 %v2369
        %2678 = vmatpush.bf16.msra.mxu0 %v2368
        %2679 = vmatpush.bf16.msra.mxu0 %v2367
        %2680 = vmatpush.bf16.msra.mxu0 %v2366
        %2681 = vmatmul.bf16.gmra.mxu0 %v2085
        %v2682 = vpop.f32.mrf.mxu0
        %v2683 = vadd.f32 %v2594, %v2682
        %v2684 = vpop.f32.mrf.mxu0
        %v2685 = vadd.f32 %v2596, %v2684
        %2686 = vmatmul.bf16.gmra.mxu0 %v2089
        %v2687 = vpop.f32.mrf.mxu0
        %v2688 = vadd.f32 %v2599, %v2687
        %v2689 = vpop.f32.mrf.mxu0
        %v2690 = vadd.f32 %v2601, %v2689
        %2691 = vmatmul.bf16.gmra.mxu0 %v2093
        %v2692 = vpop.f32.mrf.mxu0
        %v2693 = vadd.f32 %v2604, %v2692
        %v2694 = vpop.f32.mrf.mxu0
        %v2695 = vadd.f32 %v2606, %v2694
        %2696 = vmatmul.bf16.gmra.mxu0 %v2097
        %v2697 = vpop.f32.mrf.mxu0
        %v2698 = vadd.f32 %v2609, %v2697
        %v2699 = vpop.f32.mrf.mxu0
        %v2700 = vadd.f32 %v2611, %v2699
        %2701 = vmatmul.bf16.gmra.mxu0 %v2101
        %v2702 = vpop.f32.mrf.mxu0
        %v2703 = vadd.f32 %v2614, %v2702
        %v2704 = vpop.f32.mrf.mxu0
        %v2705 = vadd.f32 %v2616, %v2704
        %2706 = vmatmul.bf16.gmra.mxu0 %v2105
        %v2707 = vpop.f32.mrf.mxu0
        %v2708 = vadd.f32 %v2619, %v2707
        %v2709 = vpop.f32.mrf.mxu0
        %v2710 = vadd.f32 %v2621, %v2709
        %2711 = vmatmul.bf16.gmra.mxu0 %v2109
        %v2712 = vpop.f32.mrf.mxu0
        %v2713 = vadd.f32 %v2624, %v2712
        %v2714 = vpop.f32.mrf.mxu0
        %v2715 = vadd.f32 %v2626, %v2714
        %2716 = vmatmul.bf16.gmra.mxu0 %v2113
        %v2717 = vpop.f32.mrf.mxu0
        %v2718 = vadd.f32 %v2629, %v2717
        %v2719 = vpop.f32.mrf.mxu0
        %v2720 = vadd.f32 %v2631, %v2719
        %2721 = vmatmul.bf16.gmra.mxu0 %v2117
        %v2722 = vpop.f32.mrf.mxu0
        %v2723 = vadd.f32 %v2634, %v2722
        %v2724 = vpop.f32.mrf.mxu0
        %v2725 = vadd.f32 %v2636, %v2724
        %2726 = vmatmul.bf16.gmra.mxu0 %v2121
        %v2727 = vpop.f32.mrf.mxu0
        %v2728 = vadd.f32 %v2639, %v2727
        %v2729 = vpop.f32.mrf.mxu0
        %v2730 = vadd.f32 %v2641, %v2729
        %2731 = vmatmul.bf16.gmra.mxu0 %v2125
        %v2732 = vpop.f32.mrf.mxu0
        %v2733 = vadd.f32 %v2644, %v2732
        %v2734 = vpop.f32.mrf.mxu0
        %v2735 = vadd.f32 %v2646, %v2734
        %2736 = vmatmul.bf16.gmra.mxu0 %v2129
        %v2737 = vpop.f32.mrf.mxu0
        %v2738 = vadd.f32 %v2649, %v2737
        %v2739 = vpop.f32.mrf.mxu0
        %v2740 = vadd.f32 %v2651, %v2739
        %2741 = vmatmul.bf16.gmra.mxu0 %v2133
        %v2742 = vpop.f32.mrf.mxu0
        %v2743 = vadd.f32 %v2654, %v2742
        %v2744 = vpop.f32.mrf.mxu0
        %v2745 = vadd.f32 %v2656, %v2744
        %2746 = vmatmul.bf16.gmra.mxu0 %v2137
        %v2747 = vpop.f32.mrf.mxu0
        %v2748 = vadd.f32 %v2659, %v2747
        %v2749 = vpop.f32.mrf.mxu0
        %v2750 = vadd.f32 %v2661, %v2749
        %2751 = vmatmul.bf16.gmra.mxu0 %v2141
        %v2752 = vpop.f32.mrf.mxu0
        %v2753 = vadd.f32 %v2664, %v2752
        %v2754 = vpop.f32.mrf.mxu0
        %v2755 = vadd.f32 %v2666, %v2754
        %2756 = vmatmul.bf16.gmra.mxu0 %v2145
        %v2757 = vpop.f32.mrf.mxu0
        %v2758 = vadd.f32 %v2669, %v2757
        %v2759 = vpop.f32.mrf.mxu0
        %v2760 = vadd.f32 %v2671, %v2759
        %2761 = vdwg.mxu0
        %v2762 = vpack.c.bf16 %v2683, %v2683
        %v2763 = vpack.c.bf16 %v2685, %v2685
        %v2764 = vpack.c.bf16 %v2688, %v2688
        %v2765 = vpack.c.bf16 %v2690, %v2690
        %v2766 = vpack.c.bf16 %v2693, %v2693
        %v2767 = vpack.c.bf16 %v2695, %v2695
        %v2768 = vpack.c.bf16 %v2698, %v2698
        %v2769 = vpack.c.bf16 %v2700, %v2700
        %v2770 = vpack.c.bf16 %v2703, %v2703
        %v2771 = vpack.c.bf16 %v2705, %v2705
        %v2772 = vpack.c.bf16 %v2708, %v2708
        %v2773 = vpack.c.bf16 %v2710, %v2710
        %v2774 = vpack.c.bf16 %v2713, %v2713
        %v2775 = vpack.c.bf16 %v2715, %v2715
        %v2776 = vpack.c.bf16 %v2718, %v2718
        %v2777 = vpack.c.bf16 %v2720, %v2720
        %v2778 = vpack.c.bf16 %v2723, %v2723
        %v2779 = vpack.c.bf16 %v2725, %v2725
        %v2780 = vpack.c.bf16 %v2728, %v2728
        %v2781 = vpack.c.bf16 %v2730, %v2730
        %v2782 = vpack.c.bf16 %v2733, %v2733
        %v2783 = vpack.c.bf16 %v2735, %v2735
        %v2784 = vpack.c.bf16 %v2738, %v2738
        %v2785 = vpack.c.bf16 %v2740, %v2740
        %v2786 = vpack.c.bf16 %v2743, %v2743
        %v2787 = vpack.c.bf16 %v2745, %v2745
        %v2788 = vpack.c.bf16 %v2748, %v2748
        %v2789 = vpack.c.bf16 %v2750, %v2750
        %v2790 = vpack.c.bf16 %v2753, %v2753
        %v2791 = vpack.c.bf16 %v2755, %v2755
        %v2792 = vpack.c.bf16 %v2758, %v2758
        %v2793 = vpack.c.bf16 %v2760, %v2760
        %2794 = vst [vmem:[%s422] sm:$0xf] %v2762
        %2795 = vst [vmem:[%s422 + $0x4] sm:$0xf] %v2763
        %2796 = vst [vmem:[%s422 + $0x8] sm:$0xf] %v2764
        %2797 = vst [vmem:[%s422 + $0xc] sm:$0xf] %v2765
        %2798 = vst [vmem:[%s422 + $0x10] sm:$0xf] %v2766
        %2799 = vst [vmem:[%s422 + $0x14] sm:$0xf] %v2767
        %2800 = vst [vmem:[%s422 + $0x18] sm:$0xf] %v2768
        %2801 = vst [vmem:[%s422 + $0x1c] sm:$0xf] %v2769
        %2802 = vst [vmem:[%s422 + $0x20] sm:$0xf] %v2770
        %2803 = vst [vmem:[%s422 + $0x24] sm:$0xf] %v2771
        %2804 = vst [vmem:[%s422 + $0x28] sm:$0xf] %v2772
        %2805 = vst [vmem:[%s422 + $0x2c] sm:$0xf] %v2773
        %2806 = vst [vmem:[%s422 + $0x30] sm:$0xf] %v2774
        %2807 = vst [vmem:[%s422 + $0x34] sm:$0xf] %v2775
        %2808 = vst [vmem:[%s422 + $0x38] sm:$0xf] %v2776
        %2809 = vst [vmem:[%s422 + $0x3c] sm:$0xf] %v2777
        %2810 = vst [vmem:[%s422 + $0x40] sm:$0xf] %v2778
        %2811 = vst [vmem:[%s422 + $0x44] sm:$0xf] %v2779
        %2812 = vst [vmem:[%s422 + $0x48] sm:$0xf] %v2780
        %2813 = vst [vmem:[%s422 + $0x4c] sm:$0xf] %v2781
        %2814 = vst [vmem:[%s422 + $0x50] sm:$0xf] %v2782
        %2815 = vst [vmem:[%s422 + $0x54] sm:$0xf] %v2783
        %2816 = vst [vmem:[%s422 + $0x58] sm:$0xf] %v2784
        %2817 = vst [vmem:[%s422 + $0x5c] sm:$0xf] %v2785
        %2818 = vst [vmem:[%s422 + $0x60] sm:$0xf] %v2786
        %2819 = vst [vmem:[%s422 + $0x64] sm:$0xf] %v2787
        %2820 = vst [vmem:[%s422 + $0x68] sm:$0xf] %v2788
        %2821 = vst [vmem:[%s422 + $0x6c] sm:$0xf] %v2789
        %2822 = vst [vmem:[%s422 + $0x70] sm:$0xf] %v2790
        %2823 = vst [vmem:[%s422 + $0x74] sm:$0xf] %v2791
        %2824 = vst [vmem:[%s422 + $0x78] sm:$0xf] %v2792
        %2825 = vst [vmem:[%s422 + $0x7c] sm:$0xf] %v2793
        %s2826 = sand.u32 %s231, 1
        %s2827 = scalar_lea.sflag [#allocation4], %s2826
        %s2828 = sand.u32 %s231, 1
        %s2829 = smul.addr %s2828, 128
        %s2830 = scalar_lea.vmem [#allocation7], %s2829
        // Predicated region
        $region57: #{tpu_custom_call.1} parent=47 // pred_check
          %p2831 = pneg %p241
        $region58: #{tpu_custom_call.1} parent=47 // pred_check_branch
          %2833 = sbr.rel (%p2831) target = $region60
        $region59: #{tpu_custom_call.1} parent=47 // pred_region
          %s2834 = smul.u32 32, %s31
          %2836 = vsyncadd %s2827, 0
          %s2837 = smul.addr %s32, 32
          %s2838 = sadd.s32 %s2834, %s2837
          %s2839 = smul.addr %s2838, 4
          %s2840 = scalar_lea.hbm %s7, %s2839
          %s2841 = sshll.u32 %s2830, 4
          %s2842 = int_to_ptr.vmem [resolvable:$true] %s2841
          %s2843 = sshll.u32 %s2840, 4
          %s2844 = int_to_ptr.hbm [resolvable:$true] %s2843
          %2849 = dma.vmem_to_hbm [thread:$0]  %s2842, 2048, %s2844, %s2827, 64, 64, 4
        $region60: #{tpu_custom_call.1} parent=47 // pred_fallthru
          _
      $region48: #{tpu_custom_call.1} parent=5 // pred_fallthru
        _
      %p2850 = scmp.le.s32.totalorder 2, %s22
      // Predicated region
      $region61: #{tpu_custom_call.1} parent=5 // pred_check
        %p2851 = pneg %p2850
      $region62: #{tpu_custom_call.1} parent=5 // pred_check_branch
        %2853 = sbr.rel (%p2851) target = $region64
      $region63: #{tpu_custom_call.1} parent=5 // pred_region
        %s2854 = ssub.s32 %s22, 2
        // Predicated region
        $region65: #{tpu_custom_call.1} parent=63 // pred_check
          %p2855 = pneg %p247
        $region66: #{tpu_custom_call.1} parent=63 // pred_check_branch
          %2857 = sbr.rel (%p2855) target = $region68
        $region67: #{tpu_custom_call.1} parent=63 // pred_region
          %s2858 = sand.u32 %s232, 1
          %s2859 = scalar_lea.sflag [#allocation4], %s2858
          %s2860 = sand.u32 %s232, 1
          %s2861 = smul.addr %s2860, 128
          %s2862 = scalar_lea.vmem [#allocation7], %s2861
          %2864 = dma.done %s2859, 2048
        $region68: #{tpu_custom_call.1} parent=63 // pred_fallthru
          _
      $region64: #{tpu_custom_call.1} parent=5 // pred_fallthru
        _
    $region6: #{tpu_custom_call.1} parent=1 // loop_footer
      %s26 = sadd.s32 1, %s22
    $region7: #{tpu_custom_call.1} parent=1 // loop_footer_branch
      %21 = sbr.rel target = $region3
    $region8: #{tpu_custom_call.1} parent=1 // loop_exit
      _
    %2865 = vsyncpa [#allocation3], 1
    %s2866 = scalar_lea.sflag [#allocation3], 1
    %2867 = vsyncpa %s2866, 1
    %2868 = vsyncpa [#allocation6], 1
    %s2869 = scalar_lea.sflag [#allocation6], 1
    %2870 = vsyncpa %s2869, 1
    %2871 = vsyncpa [#allocation4], 1
    %s2872 = scalar_lea.sflag [#allocation4], 1
    %2873 = vsyncpa %s2872, 1

</llo_original>
